<compile_context>
chip_gen: v6e
topology: v6e:2x2x1
jax: 0.10.0
libtpu: 0.0.40
codegen_flags: <defaults>
</compile_context>

<pallas_src>
import math

import jax
import jax.numpy as jnp
from jax.experimental import pallas as pl
from jax.experimental.pallas import tpu as pltpu


def encoder_layer_kernel(xq_ref, xf_ref, wq_ref, wk_ref, wv_ref, wo_ref, bo_ref,
                         g1_ref, b1_ref, w1_ref, bf1_ref, w2_ref, bf2_ref,
                         g2_ref, b2_ref, o_ref, k_scr, v_scr):
    """One EncoderLayer for one (batch element, query tile) grid point."""
    n_heads, E, hd = wq_ref.shape
    S = xf_ref.shape[1]
    tq = xq_ref.shape[1]
    scale = 1.0 / math.sqrt(hd)
    bf16 = jnp.bfloat16

    # Hoisted f32 bias / LayerNorm parameters (loaded once, reused everywhere).
    bo = bo_ref[...]
    g1 = g1_ref[...]
    b1 = b1_ref[...]
    bf1 = bf1_ref[...]
    bf2 = bf2_ref[...]
    g2 = g2_ref[...]
    b2 = b2_ref[...]

    # K/V for the full sequence: computed once per batch element (first query
    # tile of the "arbitrary" axis) and kept resident in VMEM scratch (bf16).
    @pl.when(pl.program_id(1) == 0)
    def _():
        xf = jnp.broadcast_to(xf_ref[0].astype(bf16), (n_heads, S, E))
        k_scr[...] = jnp.einsum('hse,hed->hsd', xf, wk_ref[...],
                                preferred_element_type=jnp.float32).astype(bf16)
        v_scr[...] = jnp.einsum('hse,hed->hsd', xf, wv_ref[...],
                                preferred_element_type=jnp.float32).astype(bf16)

    xq = xq_ref[0]                                        # (tq, E) f32
    xq_b = jnp.broadcast_to(xq.astype(bf16), (n_heads, tq, E))

    # Batched per-head Q projection: (h, tq, E) @ (h, E, hd) -> (h, tq, hd)
    qh = jnp.einsum('hqe,hed->hqd', xq_b, wq_ref[...],
                    preferred_element_type=jnp.float32)

    # Batched-head attention; scores / softmax statistics in f32.
    s = jnp.einsum('hqd,hkd->hqk', qh.astype(bf16), k_scr[...],
                   preferred_element_type=jnp.float32) * scale     # (h, tq, S)
    m = jnp.max(s, axis=-1, keepdims=True)
    p = jnp.exp(s - m)
    l = jnp.sum(p, axis=-1, keepdims=True)
    p = p * pl.reciprocal(l, approx=True)
    att_h = jnp.einsum('hqk,hkd->hqd', p.astype(bf16), v_scr[...],
                       preferred_element_type=jnp.float32)         # (h, tq, hd)

    # Output projection: sum over heads of (tq, hd) @ (hd, E) per head, which is
    # mathematically identical to concat(heads) @ Wo but avoids the concatenate.
    att = jnp.einsum('hqd,hde->hqe', att_h.astype(bf16), wo_ref[...],
                     preferred_element_type=jnp.float32).sum(axis=0) + bo

    def layer_norm(z, g, b):
        mu = jnp.mean(z, axis=-1, keepdims=True)
        var = jnp.mean((z - mu) ** 2, axis=-1, keepdims=True)
        return (z - mu) * jax.lax.rsqrt(var + 1e-5) * g + b

    # TODO(synk): nn.Dropout is modeled as identity (eval-mode semantics).
    y1 = layer_norm(xq + att, g1, b1)

    # FeedForward: Linear -> exact GELU -> Linear (matmuls bf16, math f32).
    h1 = jnp.dot(y1.astype(bf16), w1_ref[...],
                 preferred_element_type=jnp.float32) + bf1
    h1 = 0.5 * h1 * (1.0 + jax.lax.erf(h1 * (1.0 / math.sqrt(2.0))))
    ff = jnp.dot(h1.astype(bf16), w2_ref[...],
                 preferred_element_type=jnp.float32) + bf2

    o_ref[0] = layer_norm(ff + y1, g2, b2).astype(o_ref.dtype)


def encoder_layer(x, params, n_heads):
    B, S, E = x.shape
    assert E % n_heads == 0
    hd = E // n_heads
    bf16 = jnp.bfloat16

    # Query tile: largest MXU-friendly tile (<=256) that divides S, else full S.
    tq = S
    for cand in (256, 128, 64, 32, 16, 8):
        if S % cand == 0:
            tq = cand
            break
    num_q = S // tq

    # Weight checkpoint contract: (in_features, out_features) == PyTorch W.T.
    assert params["wq"].shape == (E, E) and params["w1"].shape[0] == E

    # Per-head weight layouts prepared outside the kernel (free), MXU operands
    # cast to bf16; biases / LayerNorm params stay f32.
    wq3 = params["wq"].reshape(E, n_heads, hd).transpose(1, 0, 2).astype(bf16)
    wk3 = params["wk"].reshape(E, n_heads, hd).transpose(1, 0, 2).astype(bf16)
    wv3 = params["wv"].reshape(E, n_heads, hd).transpose(1, 0, 2).astype(bf16)
    wo3 = params["wo"].reshape(n_heads, hd, E).astype(bf16)
    w1 = params["w1"].astype(bf16)
    w2 = params["w2"].astype(bf16)
    weights = [wq3, wk3, wv3, wo3, params["bo"], params["g1"], params["b1"],
               w1, params["bf1"], w2, params["bf2"], params["g2"], params["b2"]]

    def const_spec(w):
        return pl.BlockSpec(w.shape, lambda b, q, _nd=w.ndim: (0,) * _nd)

    in_specs = [
        pl.BlockSpec((1, tq, E), lambda b, q: (b, q, 0)),   # query tile of x
        pl.BlockSpec((1, S, E), lambda b, q: (b, 0, 0)),    # full x (for K/V)
    ] + [const_spec(w) for w in weights]

    scratch_shapes = [pltpu.VMEM((n_heads, S, hd), bf16),   # K resident per batch
                      pltpu.VMEM((n_heads, S, hd), bf16)]   # V resident per batch

    # VMEM budget from actual block sizes (pipeline double-buffers each block).
    # NOTE: for very large E/H the FFN weights should additionally be K-tiled
    # over an extra 'arbitrary' grid axis (or single-buffered) instead of being
    # held fully resident.
    def nbytes(a):
        return math.prod(a.shape) * a.dtype.itemsize
    est = 2 * (tq * E * 4 + S * E * 4 + tq * E * 4)          # x tile, x full, out
    est += 2 * sum(nbytes(w) for w in weights)               # resident weights
    est += 2 * n_heads * S * hd * 2                          # K/V scratch
    vmem_limit = int(min(max(est * 3 // 2 + (4 << 20), 32 << 20), 64 << 20))

    return pl.pallas_call(
        encoder_layer_kernel,
        out_shape=jax.ShapeDtypeStruct((B, S, E), x.dtype),
        grid=(B, num_q),
        in_specs=in_specs,
        out_specs=pl.BlockSpec((1, tq, E), lambda b, q: (b, q, 0)),
        scratch_shapes=scratch_shapes,
        compiler_params=pltpu.CompilerParams(
            dimension_semantics=("parallel", "arbitrary"),
            vmem_limit_bytes=vmem_limit),
    )(x, x, *weights)


def init_layer_params(key, emb_size, hidden_size):
    ks = jax.random.split(key, 8)
    s_e = 1.0 / math.sqrt(emb_size)
    s_h = 1.0 / math.sqrt(hidden_size)
    return {
        # q/k/v per-head projections concatenated along the output axis -> (E, E)
        "wq": jax.random.normal(ks[0], (emb_size, emb_size), jnp.float32) * s_e,
        "wk": jax.random.normal(ks[1], (emb_size, emb_size), jnp.float32) * s_e,
        "wv": jax.random.normal(ks[2], (emb_size, emb_size), jnp.float32) * s_e,
        "wo": jax.random.normal(ks[3], (emb_size, emb_size), jnp.float32) * s_e,
        "bo": jax.random.normal(ks[4], (1, emb_size), jnp.float32) * 0.01,
        "g1": jnp.ones((1, emb_size), jnp.float32),
        "b1": jnp.zeros((1, emb_size), jnp.float32),
        "w1": jax.random.normal(ks[5], (emb_size, hidden_size), jnp.float32) * s_e,
        "bf1": jax.random.normal(ks[6], (1, hidden_size), jnp.float32) * 0.01,
        "w2": jax.random.normal(ks[7], (hidden_size, emb_size), jnp.float32) * s_h,
        "bf2": jnp.zeros((1, emb_size), jnp.float32),
        "g2": jnp.ones((1, emb_size), jnp.float32),
        "b2": jnp.zeros((1, emb_size), jnp.float32),
    }


def encoder_forward(x, layer_params, n_heads):
    out = x
    for p in layer_params:
        out = encoder_layer(out, p, n_heads)
    return out


if __name__ == "__main__":
    n_layers = 2
    n_heads = 4
    emb_size = 128      # lane-dense (multiple of 128)
    seq_len = 8
    batch = 2
    hidden_size = 256

    key = jax.random.PRNGKey(0)
    k_x, *k_layers = jax.random.split(key, n_layers + 1)

    x = jax.random.normal(k_x, (batch, seq_len, emb_size), jnp.float32)
    layer_params = [init_layer_params(k, emb_size, hidden_size) for k in k_layers]

    out = encoder_forward(x, layer_params, n_heads)
    jax.block_until_ready(out)
    assert out.shape == (batch, seq_len, emb_size)
    assert bool(jnp.all(jnp.isfinite(out)))
    print("KERNEL_OK")
</pallas_src>

<mosaic_0001>
module attributes {stable_mosaic.version = 11 : i64} {
  func.func @encoder_layer_kernel(%arg0: i32, %arg1: i32, %arg2: memref<1x8x128xf32, #tpu.memory_space<vmem>>, %arg3: memref<1x8x128xf32, #tpu.memory_space<vmem>>, %arg4: memref<4x128x32xbf16, #tpu.memory_space<vmem>>, %arg5: memref<4x128x32xbf16, #tpu.memory_space<vmem>>, %arg6: memref<4x128x32xbf16, #tpu.memory_space<vmem>>, %arg7: memref<4x32x128xbf16, #tpu.memory_space<vmem>>, %arg8: memref<1x128xf32, #tpu.memory_space<vmem>>, %arg9: memref<1x128xf32, #tpu.memory_space<vmem>>, %arg10: memref<1x128xf32, #tpu.memory_space<vmem>>, %arg11: memref<128x256xbf16, #tpu.memory_space<vmem>>, %arg12: memref<1x256xf32, #tpu.memory_space<vmem>>, %arg13: memref<256x128xbf16, #tpu.memory_space<vmem>>, %arg14: memref<1x128xf32, #tpu.memory_space<vmem>>, %arg15: memref<1x128xf32, #tpu.memory_space<vmem>>, %arg16: memref<1x128xf32, #tpu.memory_space<vmem>>, %arg17: memref<1x8x128xf32, #tpu.memory_space<vmem>>, %arg18: memref<4x8x32xbf16, #tpu.memory_space<vmem>>, %arg19: memref<4x8x32xbf16, #tpu.memory_space<vmem>>) attributes {dimension_semantics = [#tpu.dimension_semantics<parallel>, #tpu.dimension_semantics<arbitrary>], iteration_bounds = array<i64: 2, 1>, scalar_prefetch = 0 : i64, scratch_operands = 2 : i64, tpu.core_type = #tpu.core_type<tc>, window_params = [{transform_indices = @transform_0, window_bounds = array<i64: 1, 8, 128>}, {transform_indices = @transform_1, window_bounds = array<i64: 1, 8, 128>}, {pipeline_mode = #tpu.pipeline_mode<synchronous>, transform_indices = @transform_2, window_bounds = array<i64: 4, 128, 32>}, {pipeline_mode = #tpu.pipeline_mode<synchronous>, transform_indices = @transform_3, window_bounds = array<i64: 4, 128, 32>}, {pipeline_mode = #tpu.pipeline_mode<synchronous>, transform_indices = @transform_4, window_bounds = array<i64: 4, 128, 32>}, {pipeline_mode = #tpu.pipeline_mode<synchronous>, transform_indices = @transform_5, window_bounds = array<i64: 4, 32, 128>}, {pipeline_mode = #tpu.pipeline_mode<synchronous>, transform_indices = @transform_6, window_bounds = array<i64: 1, 128>}, {pipeline_mode = #tpu.pipeline_mode<synchronous>, transform_indices = @transform_7, window_bounds = array<i64: 1, 128>}, {pipeline_mode = #tpu.pipeline_mode<synchronous>, transform_indices = @transform_8, window_bounds = array<i64: 1, 128>}, {pipeline_mode = #tpu.pipeline_mode<synchronous>, transform_indices = @transform_9, window_bounds = array<i64: 128, 256>}, {pipeline_mode = #tpu.pipeline_mode<synchronous>, transform_indices = @transform_10, window_bounds = array<i64: 1, 256>}, {pipeline_mode = #tpu.pipeline_mode<synchronous>, transform_indices = @transform_11, window_bounds = array<i64: 256, 128>}, {pipeline_mode = #tpu.pipeline_mode<synchronous>, transform_indices = @transform_12, window_bounds = array<i64: 1, 128>}, {pipeline_mode = #tpu.pipeline_mode<synchronous>, transform_indices = @transform_13, window_bounds = array<i64: 1, 128>}, {pipeline_mode = #tpu.pipeline_mode<synchronous>, transform_indices = @transform_14, window_bounds = array<i64: 1, 128>}, {transform_indices = @transform_15, window_bounds = array<i64: 1, 8, 128>}]} {
    %c0 = arith.constant 0 : index
    %c0_0 = arith.constant 0 : index
    %0 = vector.load %arg8[%c0, %c0_0] : memref<1x128xf32, #tpu.memory_space<vmem>>, vector<1x128xf32>
    %c0_1 = arith.constant 0 : index
    %c0_2 = arith.constant 0 : index
    %1 = vector.load %arg9[%c0_1, %c0_2] : memref<1x128xf32, #tpu.memory_space<vmem>>, vector<1x128xf32>
    %c0_3 = arith.constant 0 : index
    %c0_4 = arith.constant 0 : index
    %2 = vector.load %arg10[%c0_3, %c0_4] : memref<1x128xf32, #tpu.memory_space<vmem>>, vector<1x128xf32>
    %c0_5 = arith.constant 0 : index
    %c0_6 = arith.constant 0 : index
    %3 = vector.load %arg12[%c0_5, %c0_6] : memref<1x256xf32, #tpu.memory_space<vmem>>, vector<1x256xf32>
    %c0_7 = arith.constant 0 : index
    %c0_8 = arith.constant 0 : index
    %4 = vector.load %arg14[%c0_7, %c0_8] : memref<1x128xf32, #tpu.memory_space<vmem>>, vector<1x128xf32>
    %c0_9 = arith.constant 0 : index
    %c0_10 = arith.constant 0 : index
    %5 = vector.load %arg15[%c0_9, %c0_10] : memref<1x128xf32, #tpu.memory_space<vmem>>, vector<1x128xf32>
    %c0_11 = arith.constant 0 : index
    %c0_12 = arith.constant 0 : index
    %6 = vector.load %arg16[%c0_11, %c0_12] : memref<1x128xf32, #tpu.memory_space<vmem>>, vector<1x128xf32>
    %c0_i32 = arith.constant 0 : i32
    %7 = arith.cmpi eq, %arg1, %c0_i32 : i32
    %8 = arith.extui %7 : i1 to i32
    %c0_i32_13 = arith.constant 0 : i32
    %9 = arith.cmpi ne, %8, %c0_i32_13 : i32
    scf.if %9 {
      %c0_58 = arith.constant 0 : index
      %c0_59 = arith.constant 0 : index
      %c0_60 = arith.constant 0 : index
      %108 = vector.load %arg3[%c0_58, %c0_59, %c0_60] : memref<1x8x128xf32, #tpu.memory_space<vmem>>, vector<1x8x128xf32>
      %109 = vector.shape_cast %108 : vector<1x8x128xf32> to vector<8x128xf32>
      %110 = arith.truncf %109 : vector<8x128xf32> to vector<8x128xbf16>
      %111 = vector.shape_cast %110 : vector<8x128xbf16> to vector<1x8x128xbf16>
      %112 = vector.broadcast %111 : vector<1x8x128xbf16> to vector<4x8x128xbf16>
      %c0_61 = arith.constant 0 : index
      %c0_62 = arith.constant 0 : index
      %c0_63 = arith.constant 0 : index
      %113 = vector.load %arg5[%c0_61, %c0_62, %c0_63] : memref<4x128x32xbf16, #tpu.memory_space<vmem>>, vector<4x128x32xbf16>
      "tpu.trace_start"() <{level = 10 : i32, message = "hse,hed->hsd"}> : () -> ()
      %cst_64 = arith.constant dense<0.000000e+00> : vector<4x8x32xf32>
      %114 = tpu.matmul %112, %113, %cst_64 {dimension_numbers = #tpu.dot_dimension_numbers<[2], [1], [1], [2], [0, 0, 0, 1, 1, 2], [0], [0]>} : vector<4x8x128xbf16>, vector<4x128x32xbf16>, vector<4x8x32xf32> -> vector<4x8x32xf32>
      "tpu.trace_stop"() : () -> ()
      %115 = arith.truncf %114 : vector<4x8x32xf32> to vector<4x8x32xbf16>
      %c0_65 = arith.constant 0 : index
      %c0_66 = arith.constant 0 : index
      %c0_67 = arith.constant 0 : index
      %116 = vector.load %arg18[%c0_65, %c0_66, %c0_67] : memref<4x8x32xbf16, #tpu.memory_space<vmem>>, vector<4x8x32xbf16>
      tpu.vector_store %arg18[%c0_65, %c0_66, %c0_67], %115 {strides = array<i32>} : memref<4x8x32xbf16, #tpu.memory_space<vmem>>, vector<4x8x32xbf16>,
      %c0_68 = arith.constant 0 : index
      %c0_69 = arith.constant 0 : index
      %c0_70 = arith.constant 0 : index
      %117 = vector.load %arg6[%c0_68, %c0_69, %c0_70] : memref<4x128x32xbf16, #tpu.memory_space<vmem>>, vector<4x128x32xbf16>
      "tpu.trace_start"() <{level = 10 : i32, message = "hse,hed->hsd"}> : () -> ()
      %cst_71 = arith.constant dense<0.000000e+00> : vector<4x8x32xf32>
      %118 = tpu.matmul %112, %117, %cst_71 {dimension_numbers = #tpu.dot_dimension_numbers<[2], [1], [1], [2], [0, 0, 0, 1, 1, 2], [0], [0]>} : vector<4x8x128xbf16>, vector<4x128x32xbf16>, vector<4x8x32xf32> -> vector<4x8x32xf32>
      "tpu.trace_stop"() : () -> ()
      %119 = arith.truncf %118 : vector<4x8x32xf32> to vector<4x8x32xbf16>
      %c0_72 = arith.constant 0 : index
      %c0_73 = arith.constant 0 : index
      %c0_74 = arith.constant 0 : index
      %120 = vector.load %arg19[%c0_72, %c0_73, %c0_74] : memref<4x8x32xbf16, #tpu.memory_space<vmem>>, vector<4x8x32xbf16>
      tpu.vector_store %arg19[%c0_72, %c0_73, %c0_74], %119 {strides = array<i32>} : memref<4x8x32xbf16, #tpu.memory_space<vmem>>, vector<4x8x32xbf16>,
    } else {
    }
    %c0_14 = arith.constant 0 : index
    %c0_15 = arith.constant 0 : index
    %c0_16 = arith.constant 0 : index
    %10 = vector.load %arg2[%c0_14, %c0_15, %c0_16] : memref<1x8x128xf32, #tpu.memory_space<vmem>>, vector<1x8x128xf32>
    %11 = vector.shape_cast %10 : vector<1x8x128xf32> to vector<8x128xf32>
    %12 = arith.truncf %11 : vector<8x128xf32> to vector<8x128xbf16>
    %13 = vector.shape_cast %12 : vector<8x128xbf16> to vector<1x8x128xbf16>
    %14 = vector.broadcast %13 : vector<1x8x128xbf16> to vector<4x8x128xbf16>
    %c0_17 = arith.constant 0 : index
    %c0_18 = arith.constant 0 : index
    %c0_19 = arith.constant 0 : index
    %15 = vector.load %arg4[%c0_17, %c0_18, %c0_19] : memref<4x128x32xbf16, #tpu.memory_space<vmem>>, vector<4x128x32xbf16>
    "tpu.trace_start"() <{level = 10 : i32, message = "hqe,hed->hqd"}> : () -> ()
    %cst = arith.constant dense<0.000000e+00> : vector<4x8x32xf32>
    %16 = tpu.matmul %14, %15, %cst {dimension_numbers = #tpu.dot_dimension_numbers<[2], [1], [1], [2], [0, 0, 0, 1, 1, 2], [0], [0]>} : vector<4x8x128xbf16>, vector<4x128x32xbf16>, vector<4x8x32xf32> -> vector<4x8x32xf32>
    "tpu.trace_stop"() : () -> ()
    %17 = arith.truncf %16 : vector<4x8x32xf32> to vector<4x8x32xbf16>
    %c0_20 = arith.constant 0 : index
    %c0_21 = arith.constant 0 : index
    %c0_22 = arith.constant 0 : index
    %18 = vector.load %arg18[%c0_20, %c0_21, %c0_22] : memref<4x8x32xbf16, #tpu.memory_space<vmem>>, vector<4x8x32xbf16>
    "tpu.trace_start"() <{level = 10 : i32, message = "hqd,hkd->hqk"}> : () -> ()
    %cst_23 = arith.constant dense<0.000000e+00> : vector<4x8x8xf32>
    %19 = tpu.matmul %17, %18, %cst_23 {dimension_numbers = #tpu.dot_dimension_numbers<[2], [2], [1], [1], [0, 0, 0, 1, 1, 1], [0], [0]>} : vector<4x8x32xbf16>, vector<4x8x32xbf16>, vector<4x8x8xf32> -> vector<4x8x8xf32>
    "tpu.trace_stop"() : () -> ()
    %cst_24 = arith.constant 0.176776692 : f32
    %20 = vector.broadcast %cst_24 : f32 to vector<4x8x8xf32>
    %21 = arith.mulf %19, %20 : vector<4x8x8xf32>
    %cst_25 = arith.constant dense<0xFF800000> : vector<4x8xf32>
    %22 = vector.multi_reduction <maximumf>, %21, %cst_25 [2] : vector<4x8x8xf32> to vector<4x8xf32>
    %23 = vector.shape_cast %22 : vector<4x8xf32> to vector<4x8x1xf32>
    %24 = vector.broadcast %23 : vector<4x8x1xf32> to vector<4x8x8xf32>
    %25 = arith.subf %21, %24 : vector<4x8x8xf32>
    %26 = math.exp %25 : vector<4x8x8xf32>
    %cst_26 = arith.constant dense<0.000000e+00> : vector<4x8xf32>
    %27 = vector.multi_reduction <add>, %26, %cst_26 [2] : vector<4x8x8xf32> to vector<4x8xf32>
    %28 = vector.shape_cast %27 : vector<4x8xf32> to vector<4x8x1xf32>
    %29 = tpu.reciprocal %28 {approx = true} : vector<4x8x1xf32> -> vector<4x8x1xf32>
    %30 = vector.broadcast %29 : vector<4x8x1xf32> to vector<4x8x8xf32>
    %31 = arith.mulf %26, %30 : vector<4x8x8xf32>
    %32 = arith.truncf %31 : vector<4x8x8xf32> to vector<4x8x8xbf16>
    %c0_27 = arith.constant 0 : index
    %c0_28 = arith.constant 0 : index
    %c0_29 = arith.constant 0 : index
    %33 = vector.load %arg19[%c0_27, %c0_28, %c0_29] : memref<4x8x32xbf16, #tpu.memory_space<vmem>>, vector<4x8x32xbf16>
    "tpu.trace_start"() <{level = 10 : i32, message = "hqk,hkd->hqd"}> : () -> ()
    %cst_30 = arith.constant dense<0.000000e+00> : vector<4x8x32xf32>
    %34 = tpu.matmul %32, %33, %cst_30 {dimension_numbers = #tpu.dot_dimension_numbers<[2], [1], [1], [2], [0, 0, 0, 1, 1, 2], [0], [0]>} : vector<4x8x8xbf16>, vector<4x8x32xbf16>, vector<4x8x32xf32> -> vector<4x8x32xf32>
    "tpu.trace_stop"() : () -> ()
    %35 = arith.truncf %34 : vector<4x8x32xf32> to vector<4x8x32xbf16>
    %c0_31 = arith.constant 0 : index
    %c0_32 = arith.constant 0 : index
    %c0_33 = arith.constant 0 : index
    %36 = vector.load %arg7[%c0_31, %c0_32, %c0_33] : memref<4x32x128xbf16, #tpu.memory_space<vmem>>, vector<4x32x128xbf16>
    "tpu.trace_start"() <{level = 10 : i32, message = "hqd,hde->hqe"}> : () -> ()
    %cst_34 = arith.constant dense<0.000000e+00> : vector<4x8x128xf32>
    %37 = tpu.matmul %35, %36, %cst_34 {dimension_numbers = #tpu.dot_dimension_numbers<[2], [1], [1], [2], [0, 0, 0, 1, 1, 2], [0], [0]>} : vector<4x8x32xbf16>, vector<4x32x128xbf16>, vector<4x8x128xf32> -> vector<4x8x128xf32>
    "tpu.trace_stop"() : () -> ()
    %cst_35 = arith.constant dense<0.000000e+00> : vector<8x128xf32>
    %38 = vector.multi_reduction <add>, %37, %cst_35 [0] : vector<4x8x128xf32> to vector<8x128xf32>
    %39 = vector.broadcast %0 : vector<1x128xf32> to vector<8x128xf32>
    %40 = arith.addf %38, %39 : vector<8x128xf32>
    %41 = arith.addf %11, %40 : vector<8x128xf32>
    %cst_36 = arith.constant dense<0.000000e+00> : vector<8xf32>
    %42 = vector.multi_reduction <add>, %41, %cst_36 [1] : vector<8x128xf32> to vector<8xf32>
    %43 = vector.shape_cast %42 : vector<8xf32> to vector<8x1xf32>
    %cst_37 = arith.constant 1.280000e+02 : f32
    %44 = vector.broadcast %cst_37 : f32 to vector<8x1xf32>
    %45 = arith.divf %43, %44 : vector<8x1xf32>
    %46 = vector.broadcast %45 : vector<8x1xf32> to vector<8x128xf32>
    %47 = arith.subf %41, %46 : vector<8x128xf32>
    %48 = arith.mulf %47, %47 : vector<8x128xf32>
    %cst_38 = arith.constant dense<0.000000e+00> : vector<8xf32>
    %49 = vector.multi_reduction <add>, %48, %cst_38 [1] : vector<8x128xf32> to vector<8xf32>
    %50 = vector.shape_cast %49 : vector<8xf32> to vector<8x1xf32>
    %cst_39 = arith.constant 1.280000e+02 : f32
    %51 = vector.broadcast %cst_39 : f32 to vector<8x1xf32>
    %52 = arith.divf %50, %51 : vector<8x1xf32>
    %53 = vector.broadcast %45 : vector<8x1xf32> to vector<8x128xf32>
    %54 = arith.subf %41, %53 : vector<8x128xf32>
    %cst_40 = arith.constant 9.99999974E-6 : f32
    %55 = vector.broadcast %cst_40 : f32 to vector<8x1xf32>
    %56 = arith.addf %52, %55 : vector<8x1xf32>
    %57 = math.rsqrt %56 : vector<8x1xf32>
    %58 = vector.broadcast %57 : vector<8x1xf32> to vector<8x128xf32>
    %59 = arith.mulf %54, %58 : vector<8x128xf32>
    %60 = vector.broadcast %1 : vector<1x128xf32> to vector<8x128xf32>
    %61 = arith.mulf %59, %60 : vector<8x128xf32>
    %62 = vector.broadcast %2 : vector<1x128xf32> to vector<8x128xf32>
    %63 = arith.addf %61, %62 : vector<8x128xf32>
    %64 = arith.truncf %63 : vector<8x128xf32> to vector<8x128xbf16>
    %c0_41 = arith.constant 0 : index
    %c0_42 = arith.constant 0 : index
    %65 = vector.load %arg11[%c0_41, %c0_42] : memref<128x256xbf16, #tpu.memory_space<vmem>>, vector<128x256xbf16>
    %cst_43 = arith.constant dense<0.000000e+00> : vector<8x256xf32>
    %66 = tpu.matmul %64, %65, %cst_43 {dimension_numbers = #tpu.dot_dimension_numbers<[1], [0], [0], [1], [0, 0, 1, 1], [], []>} : vector<8x128xbf16>, vector<128x256xbf16>, vector<8x256xf32> -> vector<8x256xf32>
    %67 = vector.broadcast %3 : vector<1x256xf32> to vector<8x256xf32>
    %68 = arith.addf %66, %67 : vector<8x256xf32>
    %cst_44 = arith.constant 5.000000e-01 : f32
    %69 = vector.broadcast %cst_44 : f32 to vector<8x256xf32>
    %70 = arith.mulf %69, %68 : vector<8x256xf32>
    %cst_45 = arith.constant 0.707106769 : f32
    %71 = vector.broadcast %cst_45 : f32 to vector<8x256xf32>
    %72 = arith.mulf %68, %71 : vector<8x256xf32>
    %73 = math.erf %72 : vector<8x256xf32>
    %cst_46 = arith.constant 1.000000e+00 : f32
    %74 = vector.broadcast %cst_46 : f32 to vector<8x256xf32>
    %75 = arith.addf %74, %73 : vector<8x256xf32>
    %76 = arith.mulf %70, %75 : vector<8x256xf32>
    %77 = arith.truncf %76 : vector<8x256xf32> to vector<8x256xbf16>
    %c0_47 = arith.constant 0 : index
    %c0_48 = arith.constant 0 : index
    %78 = vector.load %arg13[%c0_47, %c0_48] : memref<256x128xbf16, #tpu.memory_space<vmem>>, vector<256x128xbf16>
    %cst_49 = arith.constant dense<0.000000e+00> : vector<8x128xf32>
    %79 = tpu.matmul %77, %78, %cst_49 {dimension_numbers = #tpu.dot_dimension_numbers<[1], [0], [0], [1], [0, 0, 1, 1], [], []>} : vector<8x256xbf16>, vector<256x128xbf16>, vector<8x128xf32> -> vector<8x128xf32>
    %80 = vector.broadcast %4 : vector<1x128xf32> to vector<8x128xf32>
    %81 = arith.addf %79, %80 : vector<8x128xf32>
    %82 = arith.addf %81, %63 : vector<8x128xf32>
    %cst_50 = arith.constant dense<0.000000e+00> : vector<8xf32>
    %83 = vector.multi_reduction <add>, %82, %cst_50 [1] : vector<8x128xf32> to vector<8xf32>
    %84 = vector.shape_cast %83 : vector<8xf32> to vector<8x1xf32>
    %cst_51 = arith.constant 1.280000e+02 : f32
    %85 = vector.broadcast %cst_51 : f32 to vector<8x1xf32>
    %86 = arith.divf %84, %85 : vector<8x1xf32>
    %87 = vector.broadcast %86 : vector<8x1xf32> to vector<8x128xf32>
    %88 = arith.subf %82, %87 : vector<8x128xf32>
    %89 = arith.mulf %88, %88 : vector<8x128xf32>
    %cst_52 = arith.constant dense<0.000000e+00> : vector<8xf32>
    %90 = vector.multi_reduction <add>, %89, %cst_52 [1] : vector<8x128xf32> to vector<8xf32>
    %91 = vector.shape_cast %90 : vector<8xf32> to vector<8x1xf32>
    %cst_53 = arith.constant 1.280000e+02 : f32
    %92 = vector.broadcast %cst_53 : f32 to vector<8x1xf32>
    %93 = arith.divf %91, %92 : vector<8x1xf32>
    %94 = vector.broadcast %86 : vector<8x1xf32> to vector<8x128xf32>
    %95 = arith.subf %82, %94 : vector<8x128xf32>
    %cst_54 = arith.constant 9.99999974E-6 : f32
    %96 = vector.broadcast %cst_54 : f32 to vector<8x1xf32>
    %97 = arith.addf %93, %96 : vector<8x1xf32>
    %98 = math.rsqrt %97 : vector<8x1xf32>
    %99 = vector.broadcast %98 : vector<8x1xf32> to vector<8x128xf32>
    %100 = arith.mulf %95, %99 : vector<8x128xf32>
    %101 = vector.broadcast %5 : vector<1x128xf32> to vector<8x128xf32>
    %102 = arith.mulf %100, %101 : vector<8x128xf32>
    %103 = vector.broadcast %6 : vector<1x128xf32> to vector<8x128xf32>
    %104 = arith.addf %102, %103 : vector<8x128xf32>
    %c0_55 = arith.constant 0 : index
    %c0_56 = arith.constant 0 : index
    %c0_57 = arith.constant 0 : index
    %105 = vector.load %arg17[%c0_55, %c0_56, %c0_57] : memref<1x8x128xf32, #tpu.memory_space<vmem>>, vector<1x8x128xf32>
    %106 = vector.shape_cast %105 : vector<1x8x128xf32> to vector<8x128xf32>
    %107 = vector.shape_cast %104 : vector<8x128xf32> to vector<1x8x128xf32>
    tpu.vector_store %arg17[%c0_55, %c0_56, %c0_57], %107 {strides = array<i32>} : memref<1x8x128xf32, #tpu.memory_space<vmem>>, vector<1x8x128xf32>,
    return
  }
  func.func @transform_0(%arg0: i32, %arg1: i32) -> (i32, i32, i32) {
    %c0_i32 = arith.constant 0 : i32
    %c0_i32_0 = arith.constant 0 : i32
    return %arg0, %arg1, %c0_i32 : i32, i32, i32
  }
  func.func @transform_1(%arg0: i32, %arg1: i32) -> (i32, i32, i32) {
    %c0_i32 = arith.constant 0 : i32
    %c0_i32_0 = arith.constant 0 : i32
    %c0_i32_1 = arith.constant 0 : i32
    return %arg0, %c0_i32, %c0_i32_0 : i32, i32, i32
  }
  func.func @transform_2(%arg0: i32, %arg1: i32) -> (i32, i32, i32) {
    %c0_i32 = arith.constant 0 : i32
    %c0_i32_0 = arith.constant 0 : i32
    %c0_i32_1 = arith.constant 0 : i32
    %c0_i32_2 = arith.constant 0 : i32
    return %c0_i32, %c0_i32_0, %c0_i32_1 : i32, i32, i32
  }
  func.func @transform_3(%arg0: i32, %arg1: i32) -> (i32, i32, i32) {
    %c0_i32 = arith.constant 0 : i32
    %c0_i32_0 = arith.constant 0 : i32
    %c0_i32_1 = arith.constant 0 : i32
    %c0_i32_2 = arith.constant 0 : i32
    return %c0_i32, %c0_i32_0, %c0_i32_1 : i32, i32, i32
  }
  func.func @transform_4(%arg0: i32, %arg1: i32) -> (i32, i32, i32) {
    %c0_i32 = arith.constant 0 : i32
    %c0_i32_0 = arith.constant 0 : i32
    %c0_i32_1 = arith.constant 0 : i32
    %c0_i32_2 = arith.constant 0 : i32
    return %c0_i32, %c0_i32_0, %c0_i32_1 : i32, i32, i32
  }
  func.func @transform_5(%arg0: i32, %arg1: i32) -> (i32, i32, i32) {
    %c0_i32 = arith.constant 0 : i32
    %c0_i32_0 = arith.constant 0 : i32
    %c0_i32_1 = arith.constant 0 : i32
    %c0_i32_2 = arith.constant 0 : i32
    return %c0_i32, %c0_i32_0, %c0_i32_1 : i32, i32, i32
  }
  func.func @transform_6(%arg0: i32, %arg1: i32) -> (i32, i32) {
    %c0_i32 = arith.constant 0 : i32
    %c0_i32_0 = arith.constant 0 : i32
    %c0_i32_1 = arith.constant 0 : i32
    return %c0_i32, %c0_i32_0 : i32, i32
  }
  func.func @transform_7(%arg0: i32, %arg1: i32) -> (i32, i32) {
    %c0_i32 = arith.constant 0 : i32
    %c0_i32_0 = arith.constant 0 : i32
    %c0_i32_1 = arith.constant 0 : i32
    return %c0_i32, %c0_i32_0 : i32, i32
  }
  func.func @transform_8(%arg0: i32, %arg1: i32) -> (i32, i32) {
    %c0_i32 = arith.constant 0 : i32
    %c0_i32_0 = arith.constant 0 : i32
    %c0_i32_1 = arith.constant 0 : i32
    return %c0_i32, %c0_i32_0 : i32, i32
  }
  func.func @transform_9(%arg0: i32, %arg1: i32) -> (i32, i32) {
    %c0_i32 = arith.constant 0 : i32
    %c0_i32_0 = arith.constant 0 : i32
    %c0_i32_1 = arith.constant 0 : i32
    return %c0_i32, %c0_i32_0 : i32, i32
  }
  func.func @transform_10(%arg0: i32, %arg1: i32) -> (i32, i32) {
    %c0_i32 = arith.constant 0 : i32
    %c0_i32_0 = arith.constant 0 : i32
    %c0_i32_1 = arith.constant 0 : i32
    return %c0_i32, %c0_i32_0 : i32, i32
  }
  func.func @transform_11(%arg0: i32, %arg1: i32) -> (i32, i32) {
    %c0_i32 = arith.constant 0 : i32
    %c0_i32_0 = arith.constant 0 : i32
    %c0_i32_1 = arith.constant 0 : i32
    return %c0_i32, %c0_i32_0 : i32, i32
  }
  func.func @transform_12(%arg0: i32, %arg1: i32) -> (i32, i32) {
    %c0_i32 = arith.constant 0 : i32
    %c0_i32_0 = arith.constant 0 : i32
    %c0_i32_1 = arith.constant 0 : i32
    return %c0_i32, %c0_i32_0 : i32, i32
  }
  func.func @transform_13(%arg0: i32, %arg1: i32) -> (i32, i32) {
    %c0_i32 = arith.constant 0 : i32
    %c0_i32_0 = arith.constant 0 : i32
    %c0_i32_1 = arith.constant 0 : i32
    return %c0_i32, %c0_i32_0 : i32, i32
  }
  func.func @transform_14(%arg0: i32, %arg1: i32) -> (i32, i32) {
    %c0_i32 = arith.constant 0 : i32
    %c0_i32_0 = arith.constant 0 : i32
    %c0_i32_1 = arith.constant 0 : i32
    return %c0_i32, %c0_i32_0 : i32, i32
  }
  func.func @transform_15(%arg0: i32, %arg1: i32) -> (i32, i32, i32) {
    %c0_i32 = arith.constant 0 : i32
    %c0_i32_0 = arith.constant 0 : i32
    return %arg0, %arg1, %c0_i32 : i32, i32, i32
  }
}

</mosaic_0001>

<llo_original>
// kernel: tpu_custom_call.1
$region0: #{tpu_custom_call.1}
  #allocation0 [shape = 'u32[]', space=smem, size = 0x4, offset = 0x4, fixed_abs, tag = 'smem constant byte address 0x4 - core index']
  #allocation1 [shape = 'u32[144,128]{1,0:T(1,128)}', space=vmem, size = 0x12000, scoped, tag = 'internal scratch']
  #allocation2 [shape = 'bf16[4,8,32]{2,1,0:T(8,128)(2,1)}', space=vmem, size = 0x2000, scoped, tag = 'scratch operand']
  #allocation3 [shape = 'bf16[4,8,32]{2,1,0:T(8,128)(2,1)}', space=vmem, size = 0x2000, scoped, tag = 'scratch operand']
  %s0 = inlined_call_operand.vmem [shape: f32[2,8,128], index: 0, kind: input, shape index: {}]
  %s1 = inlined_call_operand.vmem [shape: f32[2,8,128], index: 1, kind: input, shape index: {}]
  %s2 = inlined_call_operand.vmem [shape: bf16[4,128,32], index: 2, kind: input, shape index: {}]
  %s3 = inlined_call_operand.vmem [shape: bf16[4,128,32], index: 3, kind: input, shape index: {}]
  %s4 = inlined_call_operand.vmem [shape: bf16[4,128,32], index: 4, kind: input, shape index: {}]
  %s5 = inlined_call_operand.vmem [shape: bf16[4,32,128], index: 5, kind: input, shape index: {}]
  %s6 = inlined_call_operand.vmem [shape: f32[1,128], index: 6, kind: input, shape index: {}]
  %s7 = inlined_call_operand.vmem [shape: f32[1,128], index: 7, kind: input, shape index: {}]
  %s8 = inlined_call_operand.vmem [shape: f32[1,128], index: 8, kind: input, shape index: {}]
  %s9 = inlined_call_operand.vmem [shape: bf16[128,256], index: 9, kind: input, shape index: {}]
  %s10 = inlined_call_operand.vmem [shape: f32[1,256], index: 10, kind: input, shape index: {}]
  %s11 = inlined_call_operand.vmem [shape: bf16[256,128], index: 11, kind: input, shape index: {}]
  %s12 = inlined_call_operand.vmem [shape: f32[1,128], index: 12, kind: input, shape index: {}]
  %s13 = inlined_call_operand.vmem [shape: f32[1,128], index: 13, kind: input, shape index: {}]
  %s14 = inlined_call_operand.vmem [shape: f32[1,128], index: 14, kind: input, shape index: {}]
  %s15 = inlined_call_operand.hbm [shape: f32[2,8,128], index: 15, kind: output, shape index: {}]
  %s16 = sld [smem:[#allocation0]]
  $region97: #{tpu_custom_call.1} parent=0
    _
  %s18 = ssub.s32 1, %s16
  %s19 = scalar_select 0, %s18, %s16
  $region1: #{tpu_custom_call.1} parent=0
    #allocation4 [shape = 'u8[8192]{0}', space=vmem, size = 0x2000, scoped, tag = 'output window, operand 0']
    #allocation5 [shape = 's32[2]{0}', space=sflag, size = 0x8, scoped, tag = 'scoped memory for tpu_custom_call.1']
    %20 = vsyncpa [#allocation5], 0
    %s21 = scalar_lea.sflag [#allocation5], 1
    %22 = vsyncpa %s21, 0
    loop: start=0, step=1, limit=4
    $region2: #{tpu_custom_call.1} parent=1 // loop_pre_header
      _
    $region3: #{tpu_custom_call.1} parent=1 // loop_header
      %s24 = sphi 0, %s28
      %p25 = scmp.ge.s32.totalorder %s24, 4
      %s31 = sphi 0, %s43
      %s32 = sphi 0, %s39
      %s33 = sphi 0, %s31
      %s34 = sphi 0, %s32
      %s35 = sphi 0, %s33
      %s36 = sphi 0, %s34
      %s48 = sphi 0, %s50
      %s51 = sphi 0, %s48
      %s52 = sphi 0, %s51
      %s68 = sphi 0, %s52
      %s74 = sphi 0, %s76
      %s77 = sphi 0, %s74
      %s78 = sphi 0, %s77
      %s94 = sphi 0, %s78
      %s98 = sphi 0, %s98
      %s100 = sphi 0, %s98
      %s101 = sphi 0, %s100
      %s115 = sphi 0, %s101
      %s119 = sphi 0, %s119
      %s121 = sphi 0, %s119
      %s122 = sphi 0, %s121
      %s136 = sphi 0, %s122
      %s140 = sphi 0, %s140
      %s142 = sphi 0, %s140
      %s143 = sphi 0, %s142
      %s157 = sphi 0, %s143
      %s161 = sphi 0, %s161
      %s163 = sphi 0, %s161
      %s164 = sphi 0, %s163
      %s178 = sphi 0, %s164
      %s182 = sphi 0, %s182
      %s184 = sphi 0, %s182
      %s185 = sphi 0, %s184
      %s199 = sphi 0, %s185
      %s203 = sphi 0, %s203
      %s205 = sphi 0, %s203
      %s206 = sphi 0, %s205
      %s220 = sphi 0, %s206
      %s224 = sphi 0, %s224
      %s226 = sphi 0, %s224
      %s227 = sphi 0, %s226
      %s241 = sphi 0, %s227
      %s245 = sphi 0, %s245
      %s247 = sphi 0, %s245
      %s248 = sphi 0, %s247
      %s262 = sphi 0, %s248
      %s266 = sphi 0, %s266
      %s268 = sphi 0, %s266
      %s269 = sphi 0, %s268
      %s283 = sphi 0, %s269
      %s287 = sphi 0, %s287
      %s289 = sphi 0, %s287
      %s290 = sphi 0, %s289
      %s304 = sphi 0, %s290
      %s308 = sphi 0, %s308
      %s310 = sphi 0, %s308
      %s311 = sphi 0, %s310
      %s325 = sphi 0, %s311
      %s329 = sphi 0, %s329
      %s331 = sphi 0, %s329
      %s332 = sphi 0, %s331
      %s346 = sphi 0, %s332
      %s350 = sphi 0, %s350
      %s352 = sphi 0, %s350
      %s353 = sphi 0, %s352
      %s367 = sphi 0, %s353
      %s375 = sphi 0, %s377
      %s378 = sphi 0, %s375
      %s379 = sphi 0, %s378
      %s395 = sphi 0, %s379
    $region4: #{tpu_custom_call.1} parent=1 // loop_header_branch
      %27 = sbr.rel (%p25) target = $region8
    $region5: #{tpu_custom_call.1} parent=1 // loop_body
      %s29 = ssub.s32 %s24, 1
      %s30 = ssub.s32 %s24, 2
      %s37 = sadd.s32 1, %s32
      %p38 = scmp.ge.s32.totalorder %s37, 1
      %s39 = scalar_select %p38, 0, %s37
      %s40 = sadd.s32 1, %s31
      %s41 = scalar_select %p38, %s40, %s31
      %p42 = scmp.ge.s32.totalorder %s41, 2
      %s43 = scalar_select %p42, 0, %s41
      %s44 = ssub.s32 %s31, %s43
      %s45 = ssub.s32 %s32, %s39
      %s46 = sor.u32 %s44, %s45
      %p47 = scmp.eq.s32.totalorder %s46, 0
      %s49 = sadd.s32 %s48, 1
      %s50 = scalar_select %p47, %s48, %s49
      %p53 = pneg %p47
      %p54 = scmp.eq.s32.totalorder %s24, 1
      %p55 = por %p53, %p54
      %p56 = scmp.ne.s32.totalorder %s48, %s51
      %p57 = scmp.eq.s32.totalorder %s24, 0
      %p58 = por %p56, %p57
      %p59 = scmp.ne.s32.totalorder %s48, %s51
      %p60 = scmp.eq.s32.totalorder %s29, 1
      %p61 = por %p59, %p60
      %p62 = scmp.ne.s32.totalorder %s51, %s52
      %p63 = scmp.eq.s32.totalorder %s29, 0
      %p64 = por %p62, %p63
      %p65 = scmp.ne.s32.totalorder %s51, %s52
      %p66 = scmp.eq.s32.totalorder %s30, 1
      %p67 = por %p65, %p66
      %p69 = scmp.ne.s32.totalorder %s52, %s68
      %p70 = scmp.eq.s32.totalorder %s30, 0
      %p71 = por %p69, %p70
      %s72 = ssub.s32 %s31, %s43
      %p73 = scmp.eq.s32.totalorder %s72, 0
      %s75 = sadd.s32 %s74, 1
      %s76 = scalar_select %p73, %s74, %s75
      %p79 = pneg %p73
      %p80 = scmp.eq.s32.totalorder %s24, 1
      %p81 = por %p79, %p80
      %p82 = scmp.ne.s32.totalorder %s74, %s77
      %p83 = scmp.eq.s32.totalorder %s24, 0
      %p84 = por %p82, %p83
      %p85 = scmp.ne.s32.totalorder %s74, %s77
      %p86 = scmp.eq.s32.totalorder %s29, 1
      %p87 = por %p85, %p86
      %p88 = scmp.ne.s32.totalorder %s77, %s78
      %p89 = scmp.eq.s32.totalorder %s29, 0
      %p90 = por %p88, %p89
      %p91 = scmp.ne.s32.totalorder %s77, %s78
      %p92 = scmp.eq.s32.totalorder %s30, 1
      %p93 = por %p91, %p92
      %p95 = scmp.ne.s32.totalorder %s78, %s94
      %p96 = scmp.eq.s32.totalorder %s30, 0
      %p97 = por %p95, %p96
      %s99 = sadd.s32 %s98, 1
      %p102 = scmp.eq.s32.totalorder %s24, 1
      %p103 = scmp.ne.s32.totalorder %s98, %s100
      %p104 = scmp.eq.s32.totalorder %s24, 0
      %p105 = por %p103, %p104
      %p106 = scmp.ne.s32.totalorder %s98, %s100
      %p107 = scmp.eq.s32.totalorder %s29, 1
      %p108 = por %p106, %p107
      %p109 = scmp.ne.s32.totalorder %s100, %s101
      %p110 = scmp.eq.s32.totalorder %s29, 0
      %p111 = por %p109, %p110
      %p112 = scmp.ne.s32.totalorder %s100, %s101
      %p113 = scmp.eq.s32.totalorder %s30, 1
      %p114 = por %p112, %p113
      %p116 = scmp.ne.s32.totalorder %s101, %s115
      %p117 = scmp.eq.s32.totalorder %s30, 0
      %p118 = por %p116, %p117
      %s120 = sadd.s32 %s119, 1
      %p123 = scmp.eq.s32.totalorder %s24, 1
      %p124 = scmp.ne.s32.totalorder %s119, %s121
      %p125 = scmp.eq.s32.totalorder %s24, 0
      %p126 = por %p124, %p125
      %p127 = scmp.ne.s32.totalorder %s119, %s121
      %p128 = scmp.eq.s32.totalorder %s29, 1
      %p129 = por %p127, %p128
      %p130 = scmp.ne.s32.totalorder %s121, %s122
      %p131 = scmp.eq.s32.totalorder %s29, 0
      %p132 = por %p130, %p131
      %p133 = scmp.ne.s32.totalorder %s121, %s122
      %p134 = scmp.eq.s32.totalorder %s30, 1
      %p135 = por %p133, %p134
      %p137 = scmp.ne.s32.totalorder %s122, %s136
      %p138 = scmp.eq.s32.totalorder %s30, 0
      %p139 = por %p137, %p138
      %s141 = sadd.s32 %s140, 1
      %p144 = scmp.eq.s32.totalorder %s24, 1
      %p145 = scmp.ne.s32.totalorder %s140, %s142
      %p146 = scmp.eq.s32.totalorder %s24, 0
      %p147 = por %p145, %p146
      %p148 = scmp.ne.s32.totalorder %s140, %s142
      %p149 = scmp.eq.s32.totalorder %s29, 1
      %p150 = por %p148, %p149
      %p151 = scmp.ne.s32.totalorder %s142, %s143
      %p152 = scmp.eq.s32.totalorder %s29, 0
      %p153 = por %p151, %p152
      %p154 = scmp.ne.s32.totalorder %s142, %s143
      %p155 = scmp.eq.s32.totalorder %s30, 1
      %p156 = por %p154, %p155
      %p158 = scmp.ne.s32.totalorder %s143, %s157
      %p159 = scmp.eq.s32.totalorder %s30, 0
      %p160 = por %p158, %p159
      %s162 = sadd.s32 %s161, 1
      %p165 = scmp.eq.s32.totalorder %s24, 1
      %p166 = scmp.ne.s32.totalorder %s161, %s163
      %p167 = scmp.eq.s32.totalorder %s24, 0
      %p168 = por %p166, %p167
      %p169 = scmp.ne.s32.totalorder %s161, %s163
      %p170 = scmp.eq.s32.totalorder %s29, 1
      %p171 = por %p169, %p170
      %p172 = scmp.ne.s32.totalorder %s163, %s164
      %p173 = scmp.eq.s32.totalorder %s29, 0
      %p174 = por %p172, %p173
      %p175 = scmp.ne.s32.totalorder %s163, %s164
      %p176 = scmp.eq.s32.totalorder %s30, 1
      %p177 = por %p175, %p176
      %p179 = scmp.ne.s32.totalorder %s164, %s178
      %p180 = scmp.eq.s32.totalorder %s30, 0
      %p181 = por %p179, %p180
      %s183 = sadd.s32 %s182, 1
      %p186 = scmp.eq.s32.totalorder %s24, 1
      %p187 = scmp.ne.s32.totalorder %s182, %s184
      %p188 = scmp.eq.s32.totalorder %s24, 0
      %p189 = por %p187, %p188
      %p190 = scmp.ne.s32.totalorder %s182, %s184
      %p191 = scmp.eq.s32.totalorder %s29, 1
      %p192 = por %p190, %p191
      %p193 = scmp.ne.s32.totalorder %s184, %s185
      %p194 = scmp.eq.s32.totalorder %s29, 0
      %p195 = por %p193, %p194
      %p196 = scmp.ne.s32.totalorder %s184, %s185
      %p197 = scmp.eq.s32.totalorder %s30, 1
      %p198 = por %p196, %p197
      %p200 = scmp.ne.s32.totalorder %s185, %s199
      %p201 = scmp.eq.s32.totalorder %s30, 0
      %p202 = por %p200, %p201
      %s204 = sadd.s32 %s203, 1
      %p207 = scmp.eq.s32.totalorder %s24, 1
      %p208 = scmp.ne.s32.totalorder %s203, %s205
      %p209 = scmp.eq.s32.totalorder %s24, 0
      %p210 = por %p208, %p209
      %p211 = scmp.ne.s32.totalorder %s203, %s205
      %p212 = scmp.eq.s32.totalorder %s29, 1
      %p213 = por %p211, %p212
      %p214 = scmp.ne.s32.totalorder %s205, %s206
      %p215 = scmp.eq.s32.totalorder %s29, 0
      %p216 = por %p214, %p215
      %p217 = scmp.ne.s32.totalorder %s205, %s206
      %p218 = scmp.eq.s32.totalorder %s30, 1
      %p219 = por %p217, %p218
      %p221 = scmp.ne.s32.totalorder %s206, %s220
      %p222 = scmp.eq.s32.totalorder %s30, 0
      %p223 = por %p221, %p222
      %s225 = sadd.s32 %s224, 1
      %p228 = scmp.eq.s32.totalorder %s24, 1
      %p229 = scmp.ne.s32.totalorder %s224, %s226
      %p230 = scmp.eq.s32.totalorder %s24, 0
      %p231 = por %p229, %p230
      %p232 = scmp.ne.s32.totalorder %s224, %s226
      %p233 = scmp.eq.s32.totalorder %s29, 1
      %p234 = por %p232, %p233
      %p235 = scmp.ne.s32.totalorder %s226, %s227
      %p236 = scmp.eq.s32.totalorder %s29, 0
      %p237 = por %p235, %p236
      %p238 = scmp.ne.s32.totalorder %s226, %s227
      %p239 = scmp.eq.s32.totalorder %s30, 1
      %p240 = por %p238, %p239
      %p242 = scmp.ne.s32.totalorder %s227, %s241
      %p243 = scmp.eq.s32.totalorder %s30, 0
      %p244 = por %p242, %p243
      %s246 = sadd.s32 %s245, 1
      %p249 = scmp.eq.s32.totalorder %s24, 1
      %p250 = scmp.ne.s32.totalorder %s245, %s247
      %p251 = scmp.eq.s32.totalorder %s24, 0
      %p252 = por %p250, %p251
      %p253 = scmp.ne.s32.totalorder %s245, %s247
      %p254 = scmp.eq.s32.totalorder %s29, 1
      %p255 = por %p253, %p254
      %p256 = scmp.ne.s32.totalorder %s247, %s248
      %p257 = scmp.eq.s32.totalorder %s29, 0
      %p258 = por %p256, %p257
      %p259 = scmp.ne.s32.totalorder %s247, %s248
      %p260 = scmp.eq.s32.totalorder %s30, 1
      %p261 = por %p259, %p260
      %p263 = scmp.ne.s32.totalorder %s248, %s262
      %p264 = scmp.eq.s32.totalorder %s30, 0
      %p265 = por %p263, %p264
      %s267 = sadd.s32 %s266, 1
      %p270 = scmp.eq.s32.totalorder %s24, 1
      %p271 = scmp.ne.s32.totalorder %s266, %s268
      %p272 = scmp.eq.s32.totalorder %s24, 0
      %p273 = por %p271, %p272
      %p274 = scmp.ne.s32.totalorder %s266, %s268
      %p275 = scmp.eq.s32.totalorder %s29, 1
      %p276 = por %p274, %p275
      %p277 = scmp.ne.s32.totalorder %s268, %s269
      %p278 = scmp.eq.s32.totalorder %s29, 0
      %p279 = por %p277, %p278
      %p280 = scmp.ne.s32.totalorder %s268, %s269
      %p281 = scmp.eq.s32.totalorder %s30, 1
      %p282 = por %p280, %p281
      %p284 = scmp.ne.s32.totalorder %s269, %s283
      %p285 = scmp.eq.s32.totalorder %s30, 0
      %p286 = por %p284, %p285
      %s288 = sadd.s32 %s287, 1
      %p291 = scmp.eq.s32.totalorder %s24, 1
      %p292 = scmp.ne.s32.totalorder %s287, %s289
      %p293 = scmp.eq.s32.totalorder %s24, 0
      %p294 = por %p292, %p293
      %p295 = scmp.ne.s32.totalorder %s287, %s289
      %p296 = scmp.eq.s32.totalorder %s29, 1
      %p297 = por %p295, %p296
      %p298 = scmp.ne.s32.totalorder %s289, %s290
      %p299 = scmp.eq.s32.totalorder %s29, 0
      %p300 = por %p298, %p299
      %p301 = scmp.ne.s32.totalorder %s289, %s290
      %p302 = scmp.eq.s32.totalorder %s30, 1
      %p303 = por %p301, %p302
      %p305 = scmp.ne.s32.totalorder %s290, %s304
      %p306 = scmp.eq.s32.totalorder %s30, 0
      %p307 = por %p305, %p306
      %s309 = sadd.s32 %s308, 1
      %p312 = scmp.eq.s32.totalorder %s24, 1
      %p313 = scmp.ne.s32.totalorder %s308, %s310
      %p314 = scmp.eq.s32.totalorder %s24, 0
      %p315 = por %p313, %p314
      %p316 = scmp.ne.s32.totalorder %s308, %s310
      %p317 = scmp.eq.s32.totalorder %s29, 1
      %p318 = por %p316, %p317
      %p319 = scmp.ne.s32.totalorder %s310, %s311
      %p320 = scmp.eq.s32.totalorder %s29, 0
      %p321 = por %p319, %p320
      %p322 = scmp.ne.s32.totalorder %s310, %s311
      %p323 = scmp.eq.s32.totalorder %s30, 1
      %p324 = por %p322, %p323
      %p326 = scmp.ne.s32.totalorder %s311, %s325
      %p327 = scmp.eq.s32.totalorder %s30, 0
      %p328 = por %p326, %p327
      %s330 = sadd.s32 %s329, 1
      %p333 = scmp.eq.s32.totalorder %s24, 1
      %p334 = scmp.ne.s32.totalorder %s329, %s331
      %p335 = scmp.eq.s32.totalorder %s24, 0
      %p336 = por %p334, %p335
      %p337 = scmp.ne.s32.totalorder %s329, %s331
      %p338 = scmp.eq.s32.totalorder %s29, 1
      %p339 = por %p337, %p338
      %p340 = scmp.ne.s32.totalorder %s331, %s332
      %p341 = scmp.eq.s32.totalorder %s29, 0
      %p342 = por %p340, %p341
      %p343 = scmp.ne.s32.totalorder %s331, %s332
      %p344 = scmp.eq.s32.totalorder %s30, 1
      %p345 = por %p343, %p344
      %p347 = scmp.ne.s32.totalorder %s332, %s346
      %p348 = scmp.eq.s32.totalorder %s30, 0
      %p349 = por %p347, %p348
      %s351 = sadd.s32 %s350, 1
      %p354 = scmp.eq.s32.totalorder %s24, 1
      %p355 = scmp.ne.s32.totalorder %s350, %s352
      %p356 = scmp.eq.s32.totalorder %s24, 0
      %p357 = por %p355, %p356
      %p358 = scmp.ne.s32.totalorder %s350, %s352
      %p359 = scmp.eq.s32.totalorder %s29, 1
      %p360 = por %p358, %p359
      %p361 = scmp.ne.s32.totalorder %s352, %s353
      %p362 = scmp.eq.s32.totalorder %s29, 0
      %p363 = por %p361, %p362
      %p364 = scmp.ne.s32.totalorder %s352, %s353
      %p365 = scmp.eq.s32.totalorder %s30, 1
      %p366 = por %p364, %p365
      %p368 = scmp.ne.s32.totalorder %s353, %s367
      %p369 = scmp.eq.s32.totalorder %s30, 0
      %p370 = por %p368, %p369
      %s371 = ssub.s32 %s31, %s43
      %s372 = ssub.s32 %s32, %s39
      %s373 = sor.u32 %s371, %s372
      %p374 = scmp.eq.s32.totalorder %s373, 0
      %s376 = sadd.s32 %s375, 1
      %s377 = scalar_select %p374, %s375, %s376
      %p380 = pneg %p374
      %p381 = scmp.eq.s32.totalorder %s24, 1
      %p382 = por %p380, %p381
      %p383 = scmp.ne.s32.totalorder %s375, %s378
      %p384 = scmp.eq.s32.totalorder %s24, 0
      %p385 = por %p383, %p384
      %p386 = scmp.ne.s32.totalorder %s375, %s378
      %p387 = scmp.eq.s32.totalorder %s29, 1
      %p388 = por %p386, %p387
      %p389 = scmp.ne.s32.totalorder %s378, %s379
      %p390 = scmp.eq.s32.totalorder %s29, 0
      %p391 = por %p389, %p390
      %p392 = scmp.ne.s32.totalorder %s378, %s379
      %p393 = scmp.eq.s32.totalorder %s30, 1
      %p394 = por %p392, %p393
      %p396 = scmp.ne.s32.totalorder %s379, %s395
      %p397 = scmp.eq.s32.totalorder %s30, 0
      %p398 = por %p396, %p397
      %p399 = scmp.le.s32.totalorder 1, %s24
      %p400 = scmp.lt.s32.totalorder %s24, 3
      %p401 = pnand %p399, %p400
      %p402 = pneg %p401
      // Predicated region
      $region9: #{tpu_custom_call.1} parent=5 // pred_check
        _
      $region10: #{tpu_custom_call.1} parent=5 // pred_check_branch
        %404 = sbr.rel (%p401) target = $region12
      $region11: #{tpu_custom_call.1} parent=5 // pred_region
        %s405 = ssub.s32 %s24, 1
        // Predicated region
        $region13: #{tpu_custom_call.1} parent=11 // pred_check
          %p406 = pneg %p111
        $region14: #{tpu_custom_call.1} parent=11 // pred_check_branch
          %408 = sbr.rel (%p406) target = $region16
        $region15: #{tpu_custom_call.1} parent=11 // pred_region
          _
        $region16: #{tpu_custom_call.1} parent=11 // pred_fallthru
          _
        // Predicated region
        $region17: #{tpu_custom_call.1} parent=11 // pred_check
          %p409 = pneg %p132
        $region18: #{tpu_custom_call.1} parent=11 // pred_check_branch
          %411 = sbr.rel (%p409) target = $region20
        $region19: #{tpu_custom_call.1} parent=11 // pred_region
          _
        $region20: #{tpu_custom_call.1} parent=11 // pred_fallthru
          _
        // Predicated region
        $region21: #{tpu_custom_call.1} parent=11 // pred_check
          %p412 = pneg %p153
        $region22: #{tpu_custom_call.1} parent=11 // pred_check_branch
          %414 = sbr.rel (%p412) target = $region24
        $region23: #{tpu_custom_call.1} parent=11 // pred_region
          _
        $region24: #{tpu_custom_call.1} parent=11 // pred_fallthru
          _
        // Predicated region
        $region25: #{tpu_custom_call.1} parent=11 // pred_check
          %p415 = pneg %p174
        $region26: #{tpu_custom_call.1} parent=11 // pred_check_branch
          %417 = sbr.rel (%p415) target = $region28
        $region27: #{tpu_custom_call.1} parent=11 // pred_region
          _
        $region28: #{tpu_custom_call.1} parent=11 // pred_fallthru
          _
        // Predicated region
        $region29: #{tpu_custom_call.1} parent=11 // pred_check
          %p418 = pneg %p195
        $region30: #{tpu_custom_call.1} parent=11 // pred_check_branch
          %420 = sbr.rel (%p418) target = $region32
        $region31: #{tpu_custom_call.1} parent=11 // pred_region
          _
        $region32: #{tpu_custom_call.1} parent=11 // pred_fallthru
          _
        // Predicated region
        $region33: #{tpu_custom_call.1} parent=11 // pred_check
          %p421 = pneg %p216
        $region34: #{tpu_custom_call.1} parent=11 // pred_check_branch
          %423 = sbr.rel (%p421) target = $region36
        $region35: #{tpu_custom_call.1} parent=11 // pred_region
          _
        $region36: #{tpu_custom_call.1} parent=11 // pred_fallthru
          _
        // Predicated region
        $region37: #{tpu_custom_call.1} parent=11 // pred_check
          %p424 = pneg %p237
        $region38: #{tpu_custom_call.1} parent=11 // pred_check_branch
          %426 = sbr.rel (%p424) target = $region40
        $region39: #{tpu_custom_call.1} parent=11 // pred_region
          _
        $region40: #{tpu_custom_call.1} parent=11 // pred_fallthru
          _
        // Predicated region
        $region41: #{tpu_custom_call.1} parent=11 // pred_check
          %p427 = pneg %p258
        $region42: #{tpu_custom_call.1} parent=11 // pred_check_branch
          %429 = sbr.rel (%p427) target = $region44
        $region43: #{tpu_custom_call.1} parent=11 // pred_region
          _
        $region44: #{tpu_custom_call.1} parent=11 // pred_fallthru
          _
        // Predicated region
        $region45: #{tpu_custom_call.1} parent=11 // pred_check
          %p430 = pneg %p279
        $region46: #{tpu_custom_call.1} parent=11 // pred_check_branch
          %432 = sbr.rel (%p430) target = $region48
        $region47: #{tpu_custom_call.1} parent=11 // pred_region
          _
        $region48: #{tpu_custom_call.1} parent=11 // pred_fallthru
          _
        // Predicated region
        $region49: #{tpu_custom_call.1} parent=11 // pred_check
          %p433 = pneg %p300
        $region50: #{tpu_custom_call.1} parent=11 // pred_check_branch
          %435 = sbr.rel (%p433) target = $region52
        $region51: #{tpu_custom_call.1} parent=11 // pred_region
          _
        $region52: #{tpu_custom_call.1} parent=11 // pred_fallthru
          _
        // Predicated region
        $region53: #{tpu_custom_call.1} parent=11 // pred_check
          %p436 = pneg %p321
        $region54: #{tpu_custom_call.1} parent=11 // pred_check_branch
          %438 = sbr.rel (%p436) target = $region56
        $region55: #{tpu_custom_call.1} parent=11 // pred_region
          _
        $region56: #{tpu_custom_call.1} parent=11 // pred_fallthru
          _
        // Predicated region
        $region57: #{tpu_custom_call.1} parent=11 // pred_check
          %p439 = pneg %p342
        $region58: #{tpu_custom_call.1} parent=11 // pred_check_branch
          %441 = sbr.rel (%p439) target = $region60
        $region59: #{tpu_custom_call.1} parent=11 // pred_region
          _
        $region60: #{tpu_custom_call.1} parent=11 // pred_fallthru
          _
        // Predicated region
        $region61: #{tpu_custom_call.1} parent=11 // pred_check
          %p442 = pneg %p363
        $region62: #{tpu_custom_call.1} parent=11 // pred_check_branch
          %444 = sbr.rel (%p442) target = $region64
        $region63: #{tpu_custom_call.1} parent=11 // pred_region
          _
        $region64: #{tpu_custom_call.1} parent=11 // pred_fallthru
          _
      $region12: #{tpu_custom_call.1} parent=5 // pred_fallthru
        _
      %p445 = scmp.lt.s32.totalorder %s24, 2
      // Predicated region
      $region65: #{tpu_custom_call.1} parent=5 // pred_check
        %p446 = pneg %p445
      $region66: #{tpu_custom_call.1} parent=5 // pred_check_branch
        %448 = sbr.rel (%p446) target = $region68
      $region67: #{tpu_custom_call.1} parent=5 // pred_region
        // Predicated region
        $region69: #{tpu_custom_call.1} parent=67 // pred_check
          %p449 = pneg %p58
        $region70: #{tpu_custom_call.1} parent=67 // pred_check_branch
          %451 = sbr.rel (%p449) target = $region72
        $region71: #{tpu_custom_call.1} parent=67 // pred_region
          %p452 = scmp.lt.s32.totalorder %s31, 1
          %s453 = scalar_select %p452, %s31, 1
          %p454 = scmp.lt.s32.totalorder %s32, 0
          %s455 = scalar_select %p454, %s32, 0
          %s456 = sadd.s32 %s455, %s453
          %s457 = smul.addr %s456, 8
          %s458 = scalar_lea.vmem %s0, %s457
        $region72: #{tpu_custom_call.1} parent=67 // pred_fallthru
          _
        // Predicated region
        $region73: #{tpu_custom_call.1} parent=67 // pred_check
          %p459 = pneg %p84
        $region74: #{tpu_custom_call.1} parent=67 // pred_check_branch
          %461 = sbr.rel (%p459) target = $region76
        $region75: #{tpu_custom_call.1} parent=67 // pred_region
          %p462 = scmp.lt.s32.totalorder %s31, 1
          %s463 = scalar_select %p462, %s31, 1
          %s464 = smul.addr %s463, 8
          %s465 = scalar_lea.vmem %s1, %s464
        $region76: #{tpu_custom_call.1} parent=67 // pred_fallthru
          _
      $region68: #{tpu_custom_call.1} parent=5 // pred_fallthru
        _
      %p466 = scmp.le.s32.totalorder 1, %s24
      %p467 = scmp.lt.s32.totalorder %s24, 3
      %p468 = pnand %p466, %p467
      %p469 = pneg %p468
      // Predicated region
      $region77: #{tpu_custom_call.1} parent=5 // pred_check
        _
      $region78: #{tpu_custom_call.1} parent=5 // pred_check_branch
        %471 = sbr.rel (%p468) target = $region80
      $region79: #{tpu_custom_call.1} parent=5 // pred_region
        %s472 = ssub.s32 %s24, 1
        %p473 = scmp.lt.s32.totalorder %s33, 1
        %s474 = scalar_select %p473, %s33, 1
        %p475 = scmp.lt.s32.totalorder %s34, 0
        %s476 = scalar_select %p475, %s34, 0
        %s477 = sadd.s32 %s476, %s474
        %s478 = smul.addr %s477, 8
        %s479 = scalar_lea.vmem %s0, %s478
        %p480 = pneg %p64
        %p481 = pneg %p61
        %p482 = scmp.lt.s32.totalorder %s33, 1
        %s483 = scalar_select %p482, %s33, 1
        %s484 = smul.addr %s483, 8
        %s485 = scalar_lea.vmem %s1, %s484
        %p486 = pneg %p90
        %p487 = pneg %p87
        %p488 = pneg %p111
        %p489 = pneg %p108
        %p490 = pneg %p132
        %p491 = pneg %p129
        %p492 = pneg %p153
        %p493 = pneg %p150
        %p494 = pneg %p174
        %p495 = pneg %p171
        %p496 = pneg %p195
        %p497 = pneg %p192
        %p498 = pneg %p216
        %p499 = pneg %p213
        %p500 = pneg %p237
        %p501 = pneg %p234
        %p502 = pneg %p258
        %p503 = pneg %p255
        %p504 = pneg %p279
        %p505 = pneg %p276
        %p506 = pneg %p300
        %p507 = pneg %p297
        %p508 = pneg %p321
        %p509 = pneg %p318
        %p510 = pneg %p342
        %p511 = pneg %p339
        %p512 = pneg %p363
        %p513 = pneg %p360
        %p514 = pneg %p391
        %p515 = pneg %p388
        %s516 = sand.u32 %s378, 1
        %s517 = scalar_lea.sflag [#allocation5], %s516
        %s518 = sand.u32 %s378, 1
        %s519 = smul.addr %s518, 8
        %s520 = scalar_lea.vmem [#allocation4], %s519
        %p521 = scmp.lt.s32.totalorder %s33, 1
        %s522 = scalar_select %p521, %s33, 1
        %p523 = scmp.lt.s32.totalorder %s34, 0
        %s524 = scalar_select %p523, %s34, 0
        %s525 = sadd.s32 %s524, %s522
        %s526 = smul.addr %s525, 8
        %s527 = scalar_lea.vmem %s0, %s526
        %p528 = scmp.lt.s32.totalorder %s33, 1
        %s529 = scalar_select %p528, %s33, 1
        %s530 = smul.addr %s529, 8
        %s531 = scalar_lea.vmem %s1, %s530
        %v533 = vld [vmem:[%s6] sm:$0x1]
        %v534 = vld [vmem:[%s7] sm:$0x1]
        %v535 = vld [vmem:[%s8] sm:$0x1]
        %v536 = vld [vmem:[%s10] sm:$0x3]
        %v537 = vld [vmem:[%s12] sm:$0x1]
        %v538 = vld [vmem:[%s13] sm:$0x1]
        %v539 = vld [vmem:[%s14] sm:$0x1]
        %p540 = scmp.eq.s32.totalorder %s34, 0
        // Predicated region
        $region81: #{tpu_custom_call.1} parent=79 // pred_check
          %p541 = pneg %p540
        $region82: #{tpu_custom_call.1} parent=79 // pred_check_branch
          %543 = sbr.rel (%p541) target = $region84
        $region83: #{tpu_custom_call.1} parent=79 // pred_region
          %v544 = vld [vmem:[%s531] sm:$0xff]
          %v545 = vpack.c.bf16 %v544, %v544
          %v546 = vld [vmem:[%s3] sm:$0xf]
          %v547 = vld [vmem:[%s3 + $0x4] sm:$0xf]
          %v548 = vld [vmem:[%s3 + $0x8] sm:$0xf]
          %v549 = vld [vmem:[%s3 + $0xc] sm:$0xf]
          %v550 = vld [vmem:[%s3 + $0x10] sm:$0xf]
          %v551 = vld [vmem:[%s3 + $0x14] sm:$0xf]
          %v552 = vld [vmem:[%s3 + $0x18] sm:$0xf]
          %v553 = vld [vmem:[%s3 + $0x1c] sm:$0xf]
          %v554 = vld [vmem:[%s3 + $0x20] sm:$0xf]
          %v555 = vld [vmem:[%s3 + $0x24] sm:$0xf]
          %v556 = vld [vmem:[%s3 + $0x28] sm:$0xf]
          %v557 = vld [vmem:[%s3 + $0x2c] sm:$0xf]
          %v558 = vld [vmem:[%s3 + $0x30] sm:$0xf]
          %v559 = vld [vmem:[%s3 + $0x34] sm:$0xf]
          %v560 = vld [vmem:[%s3 + $0x38] sm:$0xf]
          %v561 = vld [vmem:[%s3 + $0x3c] sm:$0xf]
          %v562 = vld [vmem:[%s3 + $0x40] sm:$0xf]
          %v563 = vld [vmem:[%s3 + $0x44] sm:$0xf]
          %v564 = vld [vmem:[%s3 + $0x48] sm:$0xf]
          %v565 = vld [vmem:[%s3 + $0x4c] sm:$0xf]
          %v566 = vld [vmem:[%s3 + $0x50] sm:$0xf]
          %v567 = vld [vmem:[%s3 + $0x54] sm:$0xf]
          %v568 = vld [vmem:[%s3 + $0x58] sm:$0xf]
          %v569 = vld [vmem:[%s3 + $0x5c] sm:$0xf]
          %v570 = vld [vmem:[%s3 + $0x60] sm:$0xf]
          %v571 = vld [vmem:[%s3 + $0x64] sm:$0xf]
          %v572 = vld [vmem:[%s3 + $0x68] sm:$0xf]
          %v573 = vld [vmem:[%s3 + $0x6c] sm:$0xf]
          %v574 = vld [vmem:[%s3 + $0x70] sm:$0xf]
          %v575 = vld [vmem:[%s3 + $0x74] sm:$0xf]
          %v576 = vld [vmem:[%s3 + $0x78] sm:$0xf]
          %v577 = vld [vmem:[%s3 + $0x7c] sm:$0xf]
          %v578 = vld [vmem:[%s3 + $0x80] sm:$0xf]
          %v579 = vld [vmem:[%s3 + $0x84] sm:$0xf]
          %v580 = vld [vmem:[%s3 + $0x88] sm:$0xf]
          %v581 = vld [vmem:[%s3 + $0x8c] sm:$0xf]
          %v582 = vld [vmem:[%s3 + $0x90] sm:$0xf]
          %v583 = vld [vmem:[%s3 + $0x94] sm:$0xf]
          %v584 = vld [vmem:[%s3 + $0x98] sm:$0xf]
          %v585 = vld [vmem:[%s3 + $0x9c] sm:$0xf]
          %v586 = vld [vmem:[%s3 + $0xa0] sm:$0xf]
          %v587 = vld [vmem:[%s3 + $0xa4] sm:$0xf]
          %v588 = vld [vmem:[%s3 + $0xa8] sm:$0xf]
          %v589 = vld [vmem:[%s3 + $0xac] sm:$0xf]
          %v590 = vld [vmem:[%s3 + $0xb0] sm:$0xf]
          %v591 = vld [vmem:[%s3 + $0xb4] sm:$0xf]
          %v592 = vld [vmem:[%s3 + $0xb8] sm:$0xf]
          %v593 = vld [vmem:[%s3 + $0xbc] sm:$0xf]
          %v594 = vld [vmem:[%s3 + $0xc0] sm:$0xf]
          %v595 = vld [vmem:[%s3 + $0xc4] sm:$0xf]
          %v596 = vld [vmem:[%s3 + $0xc8] sm:$0xf]
          %v597 = vld [vmem:[%s3 + $0xcc] sm:$0xf]
          %v598 = vld [vmem:[%s3 + $0xd0] sm:$0xf]
          %v599 = vld [vmem:[%s3 + $0xd4] sm:$0xf]
          %v600 = vld [vmem:[%s3 + $0xd8] sm:$0xf]
          %v601 = vld [vmem:[%s3 + $0xdc] sm:$0xf]
          %v602 = vld [vmem:[%s3 + $0xe0] sm:$0xf]
          %v603 = vld [vmem:[%s3 + $0xe4] sm:$0xf]
          %v604 = vld [vmem:[%s3 + $0xe8] sm:$0xf]
          %v605 = vld [vmem:[%s3 + $0xec] sm:$0xf]
          %v606 = vld [vmem:[%s3 + $0xf0] sm:$0xf]
          %v607 = vld [vmem:[%s3 + $0xf4] sm:$0xf]
          %v608 = vld [vmem:[%s3 + $0xf8] sm:$0xf]
          %v609 = vld [vmem:[%s3 + $0xfc] sm:$0xf]
          %v626 = vunpack.c.l.b16 %v546
          %v627 = vunpack.c.l.b16 %v547
          %v628 = vunpack.c.l.b16 %v548
          %v629 = vunpack.c.l.b16 %v549
          %v630 = vunpack.c.l.b16 %v550
          %v631 = vunpack.c.l.b16 %v551
          %v632 = vunpack.c.l.b16 %v552
          %v633 = vunpack.c.l.b16 %v553
          %v634 = vunpack.c.l.b16 %v554
          %v635 = vunpack.c.l.b16 %v555
          %v636 = vunpack.c.l.b16 %v556
          %v637 = vunpack.c.l.b16 %v557
          %v638 = vunpack.c.l.b16 %v558
          %v639 = vunpack.c.l.b16 %v559
          %v640 = vunpack.c.l.b16 %v560
          %v641 = vunpack.c.l.b16 %v561
          %v642 = vpack.c.b16 %v627, %v626
          %v643 = vpack.c.b16 %v629, %v628
          %v644 = vpack.c.b16 %v631, %v630
          %v645 = vpack.c.b16 %v633, %v632
          %v646 = vpack.c.b16 %v635, %v634
          %v647 = vpack.c.b16 %v637, %v636
          %v648 = vpack.c.b16 %v639, %v638
          %v649 = vpack.c.b16 %v641, %v640
          %658 = vmatprep.subr.bf16.mxu0 0
          %659 = vmatpush1.bf16.msra.mxu0 %v649
          %660 = vmatprep.subr.bf16.mxu0 0
          %661 = vmatpush1.bf16.msra.mxu0 %v648
          %662 = vmatprep.subr.bf16.mxu0 0
          %663 = vmatpush1.bf16.msra.mxu0 %v647
          %664 = vmatprep.subr.bf16.mxu0 0
          %665 = vmatpush1.bf16.msra.mxu0 %v646
          %666 = vmatprep.subr.bf16.mxu0 0
          %667 = vmatpush1.bf16.msra.mxu0 %v645
          %668 = vmatprep.subr.bf16.mxu0 0
          %669 = vmatpush1.bf16.msra.mxu0 %v644
          %670 = vmatprep.subr.bf16.mxu0 0
          %671 = vmatpush1.bf16.msra.mxu0 %v643
          %672 = vmatprep.subr.bf16.mxu0 0
          %673 = vmatpush1.bf16.msra.mxu0 %v642
          %674 = vmatprep.subr.bf16.mxu0 0
          %675 = vmatpush2.bf16.msra.mxu0 0
          %676 = vmatprep.subr.bf16.mxu0 0
          %677 = vmatpush2.bf16.msra.mxu0 0
          %678 = vmatprep.subr.bf16.mxu0 0
          %679 = vmatpush2.bf16.msra.mxu0 0
          %680 = vmatprep.subr.bf16.mxu0 0
          %681 = vmatpush2.bf16.msra.mxu0 0
          %682 = vmatprep.subr.bf16.mxu0 0
          %683 = vmatpush2.bf16.msra.mxu0 0
          %684 = vmatprep.subr.bf16.mxu0 0
          %685 = vmatpush2.bf16.msra.mxu0 0
          %686 = vmatprep.subr.bf16.mxu0 0
          %687 = vmatpush2.bf16.msra.mxu0 0
          %688 = vmatprep.subr.bf16.mxu0 0
          %689 = vmatpush2.bf16.msra.mxu0 0
          %690 = vmatprep.mubr.bf16.mxu0 0
          %691 = vmatmul.mubr.bf16.gmra.mxu0 %v545
          %v692 = vpop.f32.mrf.mxu0
          %v693 = vadd.f32 0.0, %v692
          %v694 = vpop.f32.mrf.mxu0
          %v695 = vpop.f32.mrf.mxu0
          %v696 = vpop.f32.mrf.mxu0
          %697 = vdwg.mxu0
          %v714 = vunpack.c.l.b16 %v562
          %v715 = vunpack.c.l.b16 %v563
          %v716 = vunpack.c.l.b16 %v564
          %v717 = vunpack.c.l.b16 %v565
          %v718 = vunpack.c.l.b16 %v566
          %v719 = vunpack.c.l.b16 %v567
          %v720 = vunpack.c.l.b16 %v568
          %v721 = vunpack.c.l.b16 %v569
          %v722 = vunpack.c.l.b16 %v570
          %v723 = vunpack.c.l.b16 %v571
          %v724 = vunpack.c.l.b16 %v572
          %v725 = vunpack.c.l.b16 %v573
          %v726 = vunpack.c.l.b16 %v574
          %v727 = vunpack.c.l.b16 %v575
          %v728 = vunpack.c.l.b16 %v576
          %v729 = vunpack.c.l.b16 %v577
          %v730 = vpack.c.b16 %v715, %v714
          %v731 = vpack.c.b16 %v717, %v716
          %v732 = vpack.c.b16 %v719, %v718
          %v733 = vpack.c.b16 %v721, %v720
          %v734 = vpack.c.b16 %v723, %v722
          %v735 = vpack.c.b16 %v725, %v724
          %v736 = vpack.c.b16 %v727, %v726
          %v737 = vpack.c.b16 %v729, %v728
          %746 = vmatprep.subr.bf16.mxu0 0
          %747 = vmatpush1.bf16.msra.mxu0 %v737
          %748 = vmatprep.subr.bf16.mxu0 0
          %749 = vmatpush1.bf16.msra.mxu0 %v736
          %750 = vmatprep.subr.bf16.mxu0 0
          %751 = vmatpush1.bf16.msra.mxu0 %v735
          %752 = vmatprep.subr.bf16.mxu0 0
          %753 = vmatpush1.bf16.msra.mxu0 %v734
          %754 = vmatprep.subr.bf16.mxu0 0
          %755 = vmatpush1.bf16.msra.mxu0 %v733
          %756 = vmatprep.subr.bf16.mxu0 0
          %757 = vmatpush1.bf16.msra.mxu0 %v732
          %758 = vmatprep.subr.bf16.mxu0 0
          %759 = vmatpush1.bf16.msra.mxu0 %v731
          %760 = vmatprep.subr.bf16.mxu0 0
          %761 = vmatpush1.bf16.msra.mxu0 %v730
          %762 = vmatprep.subr.bf16.mxu0 0
          %763 = vmatpush2.bf16.msra.mxu0 0
          %764 = vmatprep.subr.bf16.mxu0 0
          %765 = vmatpush2.bf16.msra.mxu0 0
          %766 = vmatprep.subr.bf16.mxu0 0
          %767 = vmatpush2.bf16.msra.mxu0 0
          %768 = vmatprep.subr.bf16.mxu0 0
          %769 = vmatpush2.bf16.msra.mxu0 0
          %770 = vmatprep.subr.bf16.mxu0 0
          %771 = vmatpush2.bf16.msra.mxu0 0
          %772 = vmatprep.subr.bf16.mxu0 0
          %773 = vmatpush2.bf16.msra.mxu0 0
          %774 = vmatprep.subr.bf16.mxu0 0
          %775 = vmatpush2.bf16.msra.mxu0 0
          %776 = vmatprep.subr.bf16.mxu0 0
          %777 = vmatpush2.bf16.msra.mxu0 0
          %778 = vmatprep.mubr.bf16.mxu0 0
          %779 = vmatmul.mubr.bf16.gmra.mxu0 %v545
          %v780 = vpop.f32.mrf.mxu0
          %v781 = vadd.f32 0.0, %v780
          %v782 = vpop.f32.mrf.mxu0
          %v783 = vpop.f32.mrf.mxu0
          %v784 = vpop.f32.mrf.mxu0
          %785 = vdwg.mxu0
          %v802 = vunpack.c.l.b16 %v578
          %v803 = vunpack.c.l.b16 %v579
          %v804 = vunpack.c.l.b16 %v580
          %v805 = vunpack.c.l.b16 %v581
          %v806 = vunpack.c.l.b16 %v582
          %v807 = vunpack.c.l.b16 %v583
          %v808 = vunpack.c.l.b16 %v584
          %v809 = vunpack.c.l.b16 %v585
          %v810 = vunpack.c.l.b16 %v586
          %v811 = vunpack.c.l.b16 %v587
          %v812 = vunpack.c.l.b16 %v588
          %v813 = vunpack.c.l.b16 %v589
          %v814 = vunpack.c.l.b16 %v590
          %v815 = vunpack.c.l.b16 %v591
          %v816 = vunpack.c.l.b16 %v592
          %v817 = vunpack.c.l.b16 %v593
          %v818 = vpack.c.b16 %v803, %v802
          %v819 = vpack.c.b16 %v805, %v804
          %v820 = vpack.c.b16 %v807, %v806
          %v821 = vpack.c.b16 %v809, %v808
          %v822 = vpack.c.b16 %v811, %v810
          %v823 = vpack.c.b16 %v813, %v812
          %v824 = vpack.c.b16 %v815, %v814
          %v825 = vpack.c.b16 %v817, %v816
          %834 = vmatprep.subr.bf16.mxu0 0
          %835 = vmatpush1.bf16.msra.mxu0 %v825
          %836 = vmatprep.subr.bf16.mxu0 0
          %837 = vmatpush1.bf16.msra.mxu0 %v824
          %838 = vmatprep.subr.bf16.mxu0 0
          %839 = vmatpush1.bf16.msra.mxu0 %v823
          %840 = vmatprep.subr.bf16.mxu0 0
          %841 = vmatpush1.bf16.msra.mxu0 %v822
          %842 = vmatprep.subr.bf16.mxu0 0
          %843 = vmatpush1.bf16.msra.mxu0 %v821
          %844 = vmatprep.subr.bf16.mxu0 0
          %845 = vmatpush1.bf16.msra.mxu0 %v820
          %846 = vmatprep.subr.bf16.mxu0 0
          %847 = vmatpush1.bf16.msra.mxu0 %v819
          %848 = vmatprep.subr.bf16.mxu0 0
          %849 = vmatpush1.bf16.msra.mxu0 %v818
          %850 = vmatprep.subr.bf16.mxu0 0
          %851 = vmatpush2.bf16.msra.mxu0 0
          %852 = vmatprep.subr.bf16.mxu0 0
          %853 = vmatpush2.bf16.msra.mxu0 0
          %854 = vmatprep.subr.bf16.mxu0 0
          %855 = vmatpush2.bf16.msra.mxu0 0
          %856 = vmatprep.subr.bf16.mxu0 0
          %857 = vmatpush2.bf16.msra.mxu0 0
          %858 = vmatprep.subr.bf16.mxu0 0
          %859 = vmatpush2.bf16.msra.mxu0 0
          %860 = vmatprep.subr.bf16.mxu0 0
          %861 = vmatpush2.bf16.msra.mxu0 0
          %862 = vmatprep.subr.bf16.mxu0 0
          %863 = vmatpush2.bf16.msra.mxu0 0
          %864 = vmatprep.subr.bf16.mxu0 0
          %865 = vmatpush2.bf16.msra.mxu0 0
          %866 = vmatprep.mubr.bf16.mxu0 0
          %867 = vmatmul.mubr.bf16.gmra.mxu0 %v545
          %v868 = vpop.f32.mrf.mxu0
          %v869 = vadd.f32 0.0, %v868
          %v870 = vpop.f32.mrf.mxu0
          %v871 = vpop.f32.mrf.mxu0
          %v872 = vpop.f32.mrf.mxu0
          %873 = vdwg.mxu0
          %v890 = vunpack.c.l.b16 %v594
          %v891 = vunpack.c.l.b16 %v595
          %v892 = vunpack.c.l.b16 %v596
          %v893 = vunpack.c.l.b16 %v597
          %v894 = vunpack.c.l.b16 %v598
          %v895 = vunpack.c.l.b16 %v599
          %v896 = vunpack.c.l.b16 %v600
          %v897 = vunpack.c.l.b16 %v601
          %v898 = vunpack.c.l.b16 %v602
          %v899 = vunpack.c.l.b16 %v603
          %v900 = vunpack.c.l.b16 %v604
          %v901 = vunpack.c.l.b16 %v605
          %v902 = vunpack.c.l.b16 %v606
          %v903 = vunpack.c.l.b16 %v607
          %v904 = vunpack.c.l.b16 %v608
          %v905 = vunpack.c.l.b16 %v609
          %v906 = vpack.c.b16 %v891, %v890
          %v907 = vpack.c.b16 %v893, %v892
          %v908 = vpack.c.b16 %v895, %v894
          %v909 = vpack.c.b16 %v897, %v896
          %v910 = vpack.c.b16 %v899, %v898
          %v911 = vpack.c.b16 %v901, %v900
          %v912 = vpack.c.b16 %v903, %v902
          %v913 = vpack.c.b16 %v905, %v904
          %922 = vmatprep.subr.bf16.mxu0 0
          %923 = vmatpush1.bf16.msra.mxu0 %v913
          %924 = vmatprep.subr.bf16.mxu0 0
          %925 = vmatpush1.bf16.msra.mxu0 %v912
          %926 = vmatprep.subr.bf16.mxu0 0
          %927 = vmatpush1.bf16.msra.mxu0 %v911
          %928 = vmatprep.subr.bf16.mxu0 0
          %929 = vmatpush1.bf16.msra.mxu0 %v910
          %930 = vmatprep.subr.bf16.mxu0 0
          %931 = vmatpush1.bf16.msra.mxu0 %v909
          %932 = vmatprep.subr.bf16.mxu0 0
          %933 = vmatpush1.bf16.msra.mxu0 %v908
          %934 = vmatprep.subr.bf16.mxu0 0
          %935 = vmatpush1.bf16.msra.mxu0 %v907
          %936 = vmatprep.subr.bf16.mxu0 0
          %937 = vmatpush1.bf16.msra.mxu0 %v906
          %938 = vmatprep.subr.bf16.mxu0 0
          %939 = vmatpush2.bf16.msra.mxu0 0
          %940 = vmatprep.subr.bf16.mxu0 0
          %941 = vmatpush2.bf16.msra.mxu0 0
          %942 = vmatprep.subr.bf16.mxu0 0
          %943 = vmatpush2.bf16.msra.mxu0 0
          %944 = vmatprep.subr.bf16.mxu0 0
          %945 = vmatpush2.bf16.msra.mxu0 0
          %946 = vmatprep.subr.bf16.mxu0 0
          %947 = vmatpush2.bf16.msra.mxu0 0
          %948 = vmatprep.subr.bf16.mxu0 0
          %949 = vmatpush2.bf16.msra.mxu0 0
          %950 = vmatprep.subr.bf16.mxu0 0
          %951 = vmatpush2.bf16.msra.mxu0 0
          %952 = vmatprep.subr.bf16.mxu0 0
          %953 = vmatpush2.bf16.msra.mxu0 0
          %954 = vmatprep.mubr.bf16.mxu0 0
          %955 = vmatmul.mubr.bf16.gmra.mxu0 %v545
          %v956 = vpop.f32.mrf.mxu0
          %v957 = vadd.f32 0.0, %v956
          %v958 = vpop.f32.mrf.mxu0
          %v959 = vpop.f32.mrf.mxu0
          %v960 = vpop.f32.mrf.mxu0
          %961 = vdwg.mxu0
          %v962 = vpack.c.bf16 %v693, %v693
          %v963 = vpack.c.bf16 %v781, %v781
          %v964 = vpack.c.bf16 %v869, %v869
          %v965 = vpack.c.bf16 %v957, %v957
          %vm966 = vcmask 257024
          %967 = vst.msk [vmem:[#allocation2] sm:$0xf] %vm966, %v962
          %968 = vst.msk [vmem:[#allocation2 + $0x4] sm:$0xf] %vm966, %v963
          %969 = vst.msk [vmem:[#allocation2 + $0x8] sm:$0xf] %vm966, %v964
          %970 = vst.msk [vmem:[#allocation2 + $0xc] sm:$0xf] %vm966, %v965
          %v971 = vld [vmem:[%s4] sm:$0xf]
          %v972 = vld [vmem:[%s4 + $0x4] sm:$0xf]
          %v973 = vld [vmem:[%s4 + $0x8] sm:$0xf]
          %v974 = vld [vmem:[%s4 + $0xc] sm:$0xf]
          %v975 = vld [vmem:[%s4 + $0x10] sm:$0xf]
          %v976 = vld [vmem:[%s4 + $0x14] sm:$0xf]
          %v977 = vld [vmem:[%s4 + $0x18] sm:$0xf]
          %v978 = vld [vmem:[%s4 + $0x1c] sm:$0xf]
          %v979 = vld [vmem:[%s4 + $0x20] sm:$0xf]
          %v980 = vld [vmem:[%s4 + $0x24] sm:$0xf]
          %v981 = vld [vmem:[%s4 + $0x28] sm:$0xf]
          %v982 = vld [vmem:[%s4 + $0x2c] sm:$0xf]
          %v983 = vld [vmem:[%s4 + $0x30] sm:$0xf]
          %v984 = vld [vmem:[%s4 + $0x34] sm:$0xf]
          %v985 = vld [vmem:[%s4 + $0x38] sm:$0xf]
          %v986 = vld [vmem:[%s4 + $0x3c] sm:$0xf]
          %v987 = vld [vmem:[%s4 + $0x40] sm:$0xf]
          %v988 = vld [vmem:[%s4 + $0x44] sm:$0xf]
          %v989 = vld [vmem:[%s4 + $0x48] sm:$0xf]
          %v990 = vld [vmem:[%s4 + $0x4c] sm:$0xf]
          %v991 = vld [vmem:[%s4 + $0x50] sm:$0xf]
          %v992 = vld [vmem:[%s4 + $0x54] sm:$0xf]
          %v993 = vld [vmem:[%s4 + $0x58] sm:$0xf]
          %v994 = vld [vmem:[%s4 + $0x5c] sm:$0xf]
          %v995 = vld [vmem:[%s4 + $0x60] sm:$0xf]
          %v996 = vld [vmem:[%s4 + $0x64] sm:$0xf]
          %v997 = vld [vmem:[%s4 + $0x68] sm:$0xf]
          %v998 = vld [vmem:[%s4 + $0x6c] sm:$0xf]
          %v999 = vld [vmem:[%s4 + $0x70] sm:$0xf]
          %v1000 = vld [vmem:[%s4 + $0x74] sm:$0xf]
          %v1001 = vld [vmem:[%s4 + $0x78] sm:$0xf]
          %v1002 = vld [vmem:[%s4 + $0x7c] sm:$0xf]
          %v1003 = vld [vmem:[%s4 + $0x80] sm:$0xf]
          %v1004 = vld [vmem:[%s4 + $0x84] sm:$0xf]
          %v1005 = vld [vmem:[%s4 + $0x88] sm:$0xf]
          %v1006 = vld [vmem:[%s4 + $0x8c] sm:$0xf]
          %v1007 = vld [vmem:[%s4 + $0x90] sm:$0xf]
          %v1008 = vld [vmem:[%s4 + $0x94] sm:$0xf]
          %v1009 = vld [vmem:[%s4 + $0x98] sm:$0xf]
          %v1010 = vld [vmem:[%s4 + $0x9c] sm:$0xf]
          %v1011 = vld [vmem:[%s4 + $0xa0] sm:$0xf]
          %v1012 = vld [vmem:[%s4 + $0xa4] sm:$0xf]
          %v1013 = vld [vmem:[%s4 + $0xa8] sm:$0xf]
          %v1014 = vld [vmem:[%s4 + $0xac] sm:$0xf]
          %v1015 = vld [vmem:[%s4 + $0xb0] sm:$0xf]
          %v1016 = vld [vmem:[%s4 + $0xb4] sm:$0xf]
          %v1017 = vld [vmem:[%s4 + $0xb8] sm:$0xf]
          %v1018 = vld [vmem:[%s4 + $0xbc] sm:$0xf]
          %v1019 = vld [vmem:[%s4 + $0xc0] sm:$0xf]
          %v1020 = vld [vmem:[%s4 + $0xc4] sm:$0xf]
          %v1021 = vld [vmem:[%s4 + $0xc8] sm:$0xf]
          %v1022 = vld [vmem:[%s4 + $0xcc] sm:$0xf]
          %v1023 = vld [vmem:[%s4 + $0xd0] sm:$0xf]
          %v1024 = vld [vmem:[%s4 + $0xd4] sm:$0xf]
          %v1025 = vld [vmem:[%s4 + $0xd8] sm:$0xf]
          %v1026 = vld [vmem:[%s4 + $0xdc] sm:$0xf]
          %v1027 = vld [vmem:[%s4 + $0xe0] sm:$0xf]
          %v1028 = vld [vmem:[%s4 + $0xe4] sm:$0xf]
          %v1029 = vld [vmem:[%s4 + $0xe8] sm:$0xf]
          %v1030 = vld [vmem:[%s4 + $0xec] sm:$0xf]
          %v1031 = vld [vmem:[%s4 + $0xf0] sm:$0xf]
          %v1032 = vld [vmem:[%s4 + $0xf4] sm:$0xf]
          %v1033 = vld [vmem:[%s4 + $0xf8] sm:$0xf]
          %v1034 = vld [vmem:[%s4 + $0xfc] sm:$0xf]
          %v1051 = vunpack.c.l.b16 %v971
          %v1052 = vunpack.c.l.b16 %v972
          %v1053 = vunpack.c.l.b16 %v973
          %v1054 = vunpack.c.l.b16 %v974
          %v1055 = vunpack.c.l.b16 %v975
          %v1056 = vunpack.c.l.b16 %v976
          %v1057 = vunpack.c.l.b16 %v977
          %v1058 = vunpack.c.l.b16 %v978
          %v1059 = vunpack.c.l.b16 %v979
          %v1060 = vunpack.c.l.b16 %v980
          %v1061 = vunpack.c.l.b16 %v981
          %v1062 = vunpack.c.l.b16 %v982
          %v1063 = vunpack.c.l.b16 %v983
          %v1064 = vunpack.c.l.b16 %v984
          %v1065 = vunpack.c.l.b16 %v985
          %v1066 = vunpack.c.l.b16 %v986
          %v1067 = vpack.c.b16 %v1052, %v1051
          %v1068 = vpack.c.b16 %v1054, %v1053
          %v1069 = vpack.c.b16 %v1056, %v1055
          %v1070 = vpack.c.b16 %v1058, %v1057
          %v1071 = vpack.c.b16 %v1060, %v1059
          %v1072 = vpack.c.b16 %v1062, %v1061
          %v1073 = vpack.c.b16 %v1064, %v1063
          %v1074 = vpack.c.b16 %v1066, %v1065
          %1083 = vmatprep.subr.bf16.mxu0 0
          %1084 = vmatpush1.bf16.msra.mxu0 %v1074
          %1085 = vmatprep.subr.bf16.mxu0 0
          %1086 = vmatpush1.bf16.msra.mxu0 %v1073
          %1087 = vmatprep.subr.bf16.mxu0 0
          %1088 = vmatpush1.bf16.msra.mxu0 %v1072
          %1089 = vmatprep.subr.bf16.mxu0 0
          %1090 = vmatpush1.bf16.msra.mxu0 %v1071
          %1091 = vmatprep.subr.bf16.mxu0 0
          %1092 = vmatpush1.bf16.msra.mxu0 %v1070
          %1093 = vmatprep.subr.bf16.mxu0 0
          %1094 = vmatpush1.bf16.msra.mxu0 %v1069
          %1095 = vmatprep.subr.bf16.mxu0 0
          %1096 = vmatpush1.bf16.msra.mxu0 %v1068
          %1097 = vmatprep.subr.bf16.mxu0 0
          %1098 = vmatpush1.bf16.msra.mxu0 %v1067
          %1099 = vmatprep.subr.bf16.mxu0 0
          %1100 = vmatpush2.bf16.msra.mxu0 0
          %1101 = vmatprep.subr.bf16.mxu0 0
          %1102 = vmatpush2.bf16.msra.mxu0 0
          %1103 = vmatprep.subr.bf16.mxu0 0
          %1104 = vmatpush2.bf16.msra.mxu0 0
          %1105 = vmatprep.subr.bf16.mxu0 0
          %1106 = vmatpush2.bf16.msra.mxu0 0
          %1107 = vmatprep.subr.bf16.mxu0 0
          %1108 = vmatpush2.bf16.msra.mxu0 0
          %1109 = vmatprep.subr.bf16.mxu0 0
          %1110 = vmatpush2.bf16.msra.mxu0 0
          %1111 = vmatprep.subr.bf16.mxu0 0
          %1112 = vmatpush2.bf16.msra.mxu0 0
          %1113 = vmatprep.subr.bf16.mxu0 0
          %1114 = vmatpush2.bf16.msra.mxu0 0
          %1115 = vmatprep.mubr.bf16.mxu0 0
          %1116 = vmatmul.mubr.bf16.gmra.mxu0 %v545
          %v1117 = vpop.f32.mrf.mxu0
          %v1118 = vadd.f32 0.0, %v1117
          %v1119 = vpop.f32.mrf.mxu0
          %v1120 = vpop.f32.mrf.mxu0
          %v1121 = vpop.f32.mrf.mxu0
          %1122 = vdwg.mxu0
          %v1139 = vunpack.c.l.b16 %v987
          %v1140 = vunpack.c.l.b16 %v988
          %v1141 = vunpack.c.l.b16 %v989
          %v1142 = vunpack.c.l.b16 %v990
          %v1143 = vunpack.c.l.b16 %v991
          %v1144 = vunpack.c.l.b16 %v992
          %v1145 = vunpack.c.l.b16 %v993
          %v1146 = vunpack.c.l.b16 %v994
          %v1147 = vunpack.c.l.b16 %v995
          %v1148 = vunpack.c.l.b16 %v996
          %v1149 = vunpack.c.l.b16 %v997
          %v1150 = vunpack.c.l.b16 %v998
          %v1151 = vunpack.c.l.b16 %v999
          %v1152 = vunpack.c.l.b16 %v1000
          %v1153 = vunpack.c.l.b16 %v1001
          %v1154 = vunpack.c.l.b16 %v1002
          %v1155 = vpack.c.b16 %v1140, %v1139
          %v1156 = vpack.c.b16 %v1142, %v1141
          %v1157 = vpack.c.b16 %v1144, %v1143
          %v1158 = vpack.c.b16 %v1146, %v1145
          %v1159 = vpack.c.b16 %v1148, %v1147
          %v1160 = vpack.c.b16 %v1150, %v1149
          %v1161 = vpack.c.b16 %v1152, %v1151
          %v1162 = vpack.c.b16 %v1154, %v1153
          %1171 = vmatprep.subr.bf16.mxu0 0
          %1172 = vmatpush1.bf16.msra.mxu0 %v1162
          %1173 = vmatprep.subr.bf16.mxu0 0
          %1174 = vmatpush1.bf16.msra.mxu0 %v1161
          %1175 = vmatprep.subr.bf16.mxu0 0
          %1176 = vmatpush1.bf16.msra.mxu0 %v1160
          %1177 = vmatprep.subr.bf16.mxu0 0
          %1178 = vmatpush1.bf16.msra.mxu0 %v1159
          %1179 = vmatprep.subr.bf16.mxu0 0
          %1180 = vmatpush1.bf16.msra.mxu0 %v1158
          %1181 = vmatprep.subr.bf16.mxu0 0
          %1182 = vmatpush1.bf16.msra.mxu0 %v1157
          %1183 = vmatprep.subr.bf16.mxu0 0
          %1184 = vmatpush1.bf16.msra.mxu0 %v1156
          %1185 = vmatprep.subr.bf16.mxu0 0
          %1186 = vmatpush1.bf16.msra.mxu0 %v1155
          %1187 = vmatprep.subr.bf16.mxu0 0
          %1188 = vmatpush2.bf16.msra.mxu0 0
          %1189 = vmatprep.subr.bf16.mxu0 0
          %1190 = vmatpush2.bf16.msra.mxu0 0
          %1191 = vmatprep.subr.bf16.mxu0 0
          %1192 = vmatpush2.bf16.msra.mxu0 0
          %1193 = vmatprep.subr.bf16.mxu0 0
          %1194 = vmatpush2.bf16.msra.mxu0 0
          %1195 = vmatprep.subr.bf16.mxu0 0
          %1196 = vmatpush2.bf16.msra.mxu0 0
          %1197 = vmatprep.subr.bf16.mxu0 0
          %1198 = vmatpush2.bf16.msra.mxu0 0
          %1199 = vmatprep.subr.bf16.mxu0 0
          %1200 = vmatpush2.bf16.msra.mxu0 0
          %1201 = vmatprep.subr.bf16.mxu0 0
          %1202 = vmatpush2.bf16.msra.mxu0 0
          %1203 = vmatprep.mubr.bf16.mxu0 0
          %1204 = vmatmul.mubr.bf16.gmra.mxu0 %v545
          %v1205 = vpop.f32.mrf.mxu0
          %v1206 = vadd.f32 0.0, %v1205
          %v1207 = vpop.f32.mrf.mxu0
          %v1208 = vpop.f32.mrf.mxu0
          %v1209 = vpop.f32.mrf.mxu0
          %1210 = vdwg.mxu0
          %v1227 = vunpack.c.l.b16 %v1003
          %v1228 = vunpack.c.l.b16 %v1004
          %v1229 = vunpack.c.l.b16 %v1005
          %v1230 = vunpack.c.l.b16 %v1006
          %v1231 = vunpack.c.l.b16 %v1007
          %v1232 = vunpack.c.l.b16 %v1008
          %v1233 = vunpack.c.l.b16 %v1009
          %v1234 = vunpack.c.l.b16 %v1010
          %v1235 = vunpack.c.l.b16 %v1011
          %v1236 = vunpack.c.l.b16 %v1012
          %v1237 = vunpack.c.l.b16 %v1013
          %v1238 = vunpack.c.l.b16 %v1014
          %v1239 = vunpack.c.l.b16 %v1015
          %v1240 = vunpack.c.l.b16 %v1016
          %v1241 = vunpack.c.l.b16 %v1017
          %v1242 = vunpack.c.l.b16 %v1018
          %v1243 = vpack.c.b16 %v1228, %v1227
          %v1244 = vpack.c.b16 %v1230, %v1229
          %v1245 = vpack.c.b16 %v1232, %v1231
          %v1246 = vpack.c.b16 %v1234, %v1233
          %v1247 = vpack.c.b16 %v1236, %v1235
          %v1248 = vpack.c.b16 %v1238, %v1237
          %v1249 = vpack.c.b16 %v1240, %v1239
          %v1250 = vpack.c.b16 %v1242, %v1241
          %1259 = vmatprep.subr.bf16.mxu0 0
          %1260 = vmatpush1.bf16.msra.mxu0 %v1250
          %1261 = vmatprep.subr.bf16.mxu0 0
          %1262 = vmatpush1.bf16.msra.mxu0 %v1249
          %1263 = vmatprep.subr.bf16.mxu0 0
          %1264 = vmatpush1.bf16.msra.mxu0 %v1248
          %1265 = vmatprep.subr.bf16.mxu0 0
          %1266 = vmatpush1.bf16.msra.mxu0 %v1247
          %1267 = vmatprep.subr.bf16.mxu0 0
          %1268 = vmatpush1.bf16.msra.mxu0 %v1246
          %1269 = vmatprep.subr.bf16.mxu0 0
          %1270 = vmatpush1.bf16.msra.mxu0 %v1245
          %1271 = vmatprep.subr.bf16.mxu0 0
          %1272 = vmatpush1.bf16.msra.mxu0 %v1244
          %1273 = vmatprep.subr.bf16.mxu0 0
          %1274 = vmatpush1.bf16.msra.mxu0 %v1243
          %1275 = vmatprep.subr.bf16.mxu0 0
          %1276 = vmatpush2.bf16.msra.mxu0 0
          %1277 = vmatprep.subr.bf16.mxu0 0
          %1278 = vmatpush2.bf16.msra.mxu0 0
          %1279 = vmatprep.subr.bf16.mxu0 0
          %1280 = vmatpush2.bf16.msra.mxu0 0
          %1281 = vmatprep.subr.bf16.mxu0 0
          %1282 = vmatpush2.bf16.msra.mxu0 0
          %1283 = vmatprep.subr.bf16.mxu0 0
          %1284 = vmatpush2.bf16.msra.mxu0 0
          %1285 = vmatprep.subr.bf16.mxu0 0
          %1286 = vmatpush2.bf16.msra.mxu0 0
          %1287 = vmatprep.subr.bf16.mxu0 0
          %1288 = vmatpush2.bf16.msra.mxu0 0
          %1289 = vmatprep.subr.bf16.mxu0 0
          %1290 = vmatpush2.bf16.msra.mxu0 0
          %1291 = vmatprep.mubr.bf16.mxu0 0
          %1292 = vmatmul.mubr.bf16.gmra.mxu0 %v545
          %v1293 = vpop.f32.mrf.mxu0
          %v1294 = vadd.f32 0.0, %v1293
          %v1295 = vpop.f32.mrf.mxu0
          %v1296 = vpop.f32.mrf.mxu0
          %v1297 = vpop.f32.mrf.mxu0
          %1298 = vdwg.mxu0
          %v1315 = vunpack.c.l.b16 %v1019
          %v1316 = vunpack.c.l.b16 %v1020
          %v1317 = vunpack.c.l.b16 %v1021
          %v1318 = vunpack.c.l.b16 %v1022
          %v1319 = vunpack.c.l.b16 %v1023
          %v1320 = vunpack.c.l.b16 %v1024
          %v1321 = vunpack.c.l.b16 %v1025
          %v1322 = vunpack.c.l.b16 %v1026
          %v1323 = vunpack.c.l.b16 %v1027
          %v1324 = vunpack.c.l.b16 %v1028
          %v1325 = vunpack.c.l.b16 %v1029
          %v1326 = vunpack.c.l.b16 %v1030
          %v1327 = vunpack.c.l.b16 %v1031
          %v1328 = vunpack.c.l.b16 %v1032
          %v1329 = vunpack.c.l.b16 %v1033
          %v1330 = vunpack.c.l.b16 %v1034
          %v1331 = vpack.c.b16 %v1316, %v1315
          %v1332 = vpack.c.b16 %v1318, %v1317
          %v1333 = vpack.c.b16 %v1320, %v1319
          %v1334 = vpack.c.b16 %v1322, %v1321
          %v1335 = vpack.c.b16 %v1324, %v1323
          %v1336 = vpack.c.b16 %v1326, %v1325
          %v1337 = vpack.c.b16 %v1328, %v1327
          %v1338 = vpack.c.b16 %v1330, %v1329
          %1347 = vmatprep.subr.bf16.mxu0 0
          %1348 = vmatpush1.bf16.msra.mxu0 %v1338
          %1349 = vmatprep.subr.bf16.mxu0 0
          %1350 = vmatpush1.bf16.msra.mxu0 %v1337
          %1351 = vmatprep.subr.bf16.mxu0 0
          %1352 = vmatpush1.bf16.msra.mxu0 %v1336
          %1353 = vmatprep.subr.bf16.mxu0 0
          %1354 = vmatpush1.bf16.msra.mxu0 %v1335
          %1355 = vmatprep.subr.bf16.mxu0 0
          %1356 = vmatpush1.bf16.msra.mxu0 %v1334
          %1357 = vmatprep.subr.bf16.mxu0 0
          %1358 = vmatpush1.bf16.msra.mxu0 %v1333
          %1359 = vmatprep.subr.bf16.mxu0 0
          %1360 = vmatpush1.bf16.msra.mxu0 %v1332
          %1361 = vmatprep.subr.bf16.mxu0 0
          %1362 = vmatpush1.bf16.msra.mxu0 %v1331
          %1363 = vmatprep.subr.bf16.mxu0 0
          %1364 = vmatpush2.bf16.msra.mxu0 0
          %1365 = vmatprep.subr.bf16.mxu0 0
          %1366 = vmatpush2.bf16.msra.mxu0 0
          %1367 = vmatprep.subr.bf16.mxu0 0
          %1368 = vmatpush2.bf16.msra.mxu0 0
          %1369 = vmatprep.subr.bf16.mxu0 0
          %1370 = vmatpush2.bf16.msra.mxu0 0
          %1371 = vmatprep.subr.bf16.mxu0 0
          %1372 = vmatpush2.bf16.msra.mxu0 0
          %1373 = vmatprep.subr.bf16.mxu0 0
          %1374 = vmatpush2.bf16.msra.mxu0 0
          %1375 = vmatprep.subr.bf16.mxu0 0
          %1376 = vmatpush2.bf16.msra.mxu0 0
          %1377 = vmatprep.subr.bf16.mxu0 0
          %1378 = vmatpush2.bf16.msra.mxu0 0
          %1379 = vmatprep.mubr.bf16.mxu0 0
          %1380 = vmatmul.mubr.bf16.gmra.mxu0 %v545
          %v1381 = vpop.f32.mrf.mxu0
          %v1382 = vadd.f32 0.0, %v1381
          %v1383 = vpop.f32.mrf.mxu0
          %v1384 = vpop.f32.mrf.mxu0
          %v1385 = vpop.f32.mrf.mxu0
          %1386 = vdwg.mxu0
          %v1387 = vpack.c.bf16 %v1118, %v1118
          %v1388 = vpack.c.bf16 %v1206, %v1206
          %v1389 = vpack.c.bf16 %v1294, %v1294
          %v1390 = vpack.c.bf16 %v1382, %v1382
          %1391 = vst.msk [vmem:[#allocation3] sm:$0xf] %vm966, %v1387
          %1392 = vst.msk [vmem:[#allocation3 + $0x4] sm:$0xf] %vm966, %v1388
          %1393 = vst.msk [vmem:[#allocation3 + $0x8] sm:$0xf] %vm966, %v1389
          %1394 = vst.msk [vmem:[#allocation3 + $0xc] sm:$0xf] %vm966, %v1390
        $region84: #{tpu_custom_call.1} parent=79 // pred_fallthru
          _
        %v1395 = vld [vmem:[%s527] sm:$0xff]
        %v1396 = vpack.c.bf16 %v1395, %v1395
        %v1397 = vld [vmem:[%s2] sm:$0xf]
        %v1398 = vld [vmem:[%s2 + $0x4] sm:$0xf]
        %v1399 = vld [vmem:[%s2 + $0x8] sm:$0xf]
        %v1400 = vld [vmem:[%s2 + $0xc] sm:$0xf]
        %v1401 = vld [vmem:[%s2 + $0x10] sm:$0xf]
        %v1402 = vld [vmem:[%s2 + $0x14] sm:$0xf]
        %v1403 = vld [vmem:[%s2 + $0x18] sm:$0xf]
        %v1404 = vld [vmem:[%s2 + $0x1c] sm:$0xf]
        %v1405 = vld [vmem:[%s2 + $0x20] sm:$0xf]
        %v1406 = vld [vmem:[%s2 + $0x24] sm:$0xf]
        %v1407 = vld [vmem:[%s2 + $0x28] sm:$0xf]
        %v1408 = vld [vmem:[%s2 + $0x2c] sm:$0xf]
        %v1409 = vld [vmem:[%s2 + $0x30] sm:$0xf]
        %v1410 = vld [vmem:[%s2 + $0x34] sm:$0xf]
        %v1411 = vld [vmem:[%s2 + $0x38] sm:$0xf]
        %v1412 = vld [vmem:[%s2 + $0x3c] sm:$0xf]
        %v1413 = vld [vmem:[%s2 + $0x40] sm:$0xf]
        %v1414 = vld [vmem:[%s2 + $0x44] sm:$0xf]
        %v1415 = vld [vmem:[%s2 + $0x48] sm:$0xf]
        %v1416 = vld [vmem:[%s2 + $0x4c] sm:$0xf]
        %v1417 = vld [vmem:[%s2 + $0x50] sm:$0xf]
        %v1418 = vld [vmem:[%s2 + $0x54] sm:$0xf]
        %v1419 = vld [vmem:[%s2 + $0x58] sm:$0xf]
        %v1420 = vld [vmem:[%s2 + $0x5c] sm:$0xf]
        %v1421 = vld [vmem:[%s2 + $0x60] sm:$0xf]
        %v1422 = vld [vmem:[%s2 + $0x64] sm:$0xf]
        %v1423 = vld [vmem:[%s2 + $0x68] sm:$0xf]
        %v1424 = vld [vmem:[%s2 + $0x6c] sm:$0xf]
        %v1425 = vld [vmem:[%s2 + $0x70] sm:$0xf]
        %v1426 = vld [vmem:[%s2 + $0x74] sm:$0xf]
        %v1427 = vld [vmem:[%s2 + $0x78] sm:$0xf]
        %v1428 = vld [vmem:[%s2 + $0x7c] sm:$0xf]
        %v1429 = vld [vmem:[%s2 + $0x80] sm:$0xf]
        %v1430 = vld [vmem:[%s2 + $0x84] sm:$0xf]
        %v1431 = vld [vmem:[%s2 + $0x88] sm:$0xf]
        %v1432 = vld [vmem:[%s2 + $0x8c] sm:$0xf]
        %v1433 = vld [vmem:[%s2 + $0x90] sm:$0xf]
        %v1434 = vld [vmem:[%s2 + $0x94] sm:$0xf]
        %v1435 = vld [vmem:[%s2 + $0x98] sm:$0xf]
        %v1436 = vld [vmem:[%s2 + $0x9c] sm:$0xf]
        %v1437 = vld [vmem:[%s2 + $0xa0] sm:$0xf]
        %v1438 = vld [vmem:[%s2 + $0xa4] sm:$0xf]
        %v1439 = vld [vmem:[%s2 + $0xa8] sm:$0xf]
        %v1440 = vld [vmem:[%s2 + $0xac] sm:$0xf]
        %v1441 = vld [vmem:[%s2 + $0xb0] sm:$0xf]
        %v1442 = vld [vmem:[%s2 + $0xb4] sm:$0xf]
        %v1443 = vld [vmem:[%s2 + $0xb8] sm:$0xf]
        %v1444 = vld [vmem:[%s2 + $0xbc] sm:$0xf]
        %v1445 = vld [vmem:[%s2 + $0xc0] sm:$0xf]
        %v1446 = vld [vmem:[%s2 + $0xc4] sm:$0xf]
        %v1447 = vld [vmem:[%s2 + $0xc8] sm:$0xf]
        %v1448 = vld [vmem:[%s2 + $0xcc] sm:$0xf]
        %v1449 = vld [vmem:[%s2 + $0xd0] sm:$0xf]
        %v1450 = vld [vmem:[%s2 + $0xd4] sm:$0xf]
        %v1451 = vld [vmem:[%s2 + $0xd8] sm:$0xf]
        %v1452 = vld [vmem:[%s2 + $0xdc] sm:$0xf]
        %v1453 = vld [vmem:[%s2 + $0xe0] sm:$0xf]
        %v1454 = vld [vmem:[%s2 + $0xe4] sm:$0xf]
        %v1455 = vld [vmem:[%s2 + $0xe8] sm:$0xf]
        %v1456 = vld [vmem:[%s2 + $0xec] sm:$0xf]
        %v1457 = vld [vmem:[%s2 + $0xf0] sm:$0xf]
        %v1458 = vld [vmem:[%s2 + $0xf4] sm:$0xf]
        %v1459 = vld [vmem:[%s2 + $0xf8] sm:$0xf]
        %v1460 = vld [vmem:[%s2 + $0xfc] sm:$0xf]
        %v1477 = vunpack.c.l.b16 %v1397
        %v1478 = vunpack.c.l.b16 %v1398
        %v1479 = vunpack.c.l.b16 %v1399
        %v1480 = vunpack.c.l.b16 %v1400
        %v1481 = vunpack.c.l.b16 %v1401
        %v1482 = vunpack.c.l.b16 %v1402
        %v1483 = vunpack.c.l.b16 %v1403
        %v1484 = vunpack.c.l.b16 %v1404
        %v1485 = vunpack.c.l.b16 %v1405
        %v1486 = vunpack.c.l.b16 %v1406
        %v1487 = vunpack.c.l.b16 %v1407
        %v1488 = vunpack.c.l.b16 %v1408
        %v1489 = vunpack.c.l.b16 %v1409
        %v1490 = vunpack.c.l.b16 %v1410
        %v1491 = vunpack.c.l.b16 %v1411
        %v1492 = vunpack.c.l.b16 %v1412
        %v1493 = vpack.c.b16 %v1478, %v1477
        %v1494 = vpack.c.b16 %v1480, %v1479
        %v1495 = vpack.c.b16 %v1482, %v1481
        %v1496 = vpack.c.b16 %v1484, %v1483
        %v1497 = vpack.c.b16 %v1486, %v1485
        %v1498 = vpack.c.b16 %v1488, %v1487
        %v1499 = vpack.c.b16 %v1490, %v1489
        %v1500 = vpack.c.b16 %v1492, %v1491
        %1509 = vmatprep.subr.bf16.mxu0 0
        %1510 = vmatpush1.bf16.msra.mxu0 %v1500
        %1511 = vmatprep.subr.bf16.mxu0 0
        %1512 = vmatpush1.bf16.msra.mxu0 %v1499
        %1513 = vmatprep.subr.bf16.mxu0 0
        %1514 = vmatpush1.bf16.msra.mxu0 %v1498
        %1515 = vmatprep.subr.bf16.mxu0 0
        %1516 = vmatpush1.bf16.msra.mxu0 %v1497
        %1517 = vmatprep.subr.bf16.mxu0 0
        %1518 = vmatpush1.bf16.msra.mxu0 %v1496
        %1519 = vmatprep.subr.bf16.mxu0 0
        %1520 = vmatpush1.bf16.msra.mxu0 %v1495
        %1521 = vmatprep.subr.bf16.mxu0 0
        %1522 = vmatpush1.bf16.msra.mxu0 %v1494
        %1523 = vmatprep.subr.bf16.mxu0 0
        %1524 = vmatpush1.bf16.msra.mxu0 %v1493
        %1525 = vmatprep.subr.bf16.mxu0 0
        %1526 = vmatpush2.bf16.msra.mxu0 0
        %1527 = vmatprep.subr.bf16.mxu0 0
        %1528 = vmatpush2.bf16.msra.mxu0 0
        %1529 = vmatprep.subr.bf16.mxu0 0
        %1530 = vmatpush2.bf16.msra.mxu0 0
        %1531 = vmatprep.subr.bf16.mxu0 0
        %1532 = vmatpush2.bf16.msra.mxu0 0
        %1533 = vmatprep.subr.bf16.mxu0 0
        %1534 = vmatpush2.bf16.msra.mxu0 0
        %1535 = vmatprep.subr.bf16.mxu0 0
        %1536 = vmatpush2.bf16.msra.mxu0 0
        %1537 = vmatprep.subr.bf16.mxu0 0
        %1538 = vmatpush2.bf16.msra.mxu0 0
        %1539 = vmatprep.subr.bf16.mxu0 0
        %1540 = vmatpush2.bf16.msra.mxu0 0
        %1541 = vmatprep.mubr.bf16.mxu0 0
        %1542 = vmatmul.mubr.bf16.gmra.mxu0 %v1396
        %v1543 = vpop.f32.mrf.mxu0
        %v1544 = vadd.f32 0.0, %v1543
        %v1545 = vpop.f32.mrf.mxu0
        %v1546 = vpop.f32.mrf.mxu0
        %v1547 = vpop.f32.mrf.mxu0
        %1548 = vdwg.mxu0
        %v1565 = vunpack.c.l.b16 %v1413
        %v1566 = vunpack.c.l.b16 %v1414
        %v1567 = vunpack.c.l.b16 %v1415
        %v1568 = vunpack.c.l.b16 %v1416
        %v1569 = vunpack.c.l.b16 %v1417
        %v1570 = vunpack.c.l.b16 %v1418
        %v1571 = vunpack.c.l.b16 %v1419
        %v1572 = vunpack.c.l.b16 %v1420
        %v1573 = vunpack.c.l.b16 %v1421
        %v1574 = vunpack.c.l.b16 %v1422
        %v1575 = vunpack.c.l.b16 %v1423
        %v1576 = vunpack.c.l.b16 %v1424
        %v1577 = vunpack.c.l.b16 %v1425
        %v1578 = vunpack.c.l.b16 %v1426
        %v1579 = vunpack.c.l.b16 %v1427
        %v1580 = vunpack.c.l.b16 %v1428
        %v1581 = vpack.c.b16 %v1566, %v1565
        %v1582 = vpack.c.b16 %v1568, %v1567
        %v1583 = vpack.c.b16 %v1570, %v1569
        %v1584 = vpack.c.b16 %v1572, %v1571
        %v1585 = vpack.c.b16 %v1574, %v1573
        %v1586 = vpack.c.b16 %v1576, %v1575
        %v1587 = vpack.c.b16 %v1578, %v1577
        %v1588 = vpack.c.b16 %v1580, %v1579
        %1597 = vmatprep.subr.bf16.mxu0 0
        %1598 = vmatpush1.bf16.msra.mxu0 %v1588
        %1599 = vmatprep.subr.bf16.mxu0 0
        %1600 = vmatpush1.bf16.msra.mxu0 %v1587
        %1601 = vmatprep.subr.bf16.mxu0 0
        %1602 = vmatpush1.bf16.msra.mxu0 %v1586
        %1603 = vmatprep.subr.bf16.mxu0 0
        %1604 = vmatpush1.bf16.msra.mxu0 %v1585
        %1605 = vmatprep.subr.bf16.mxu0 0
        %1606 = vmatpush1.bf16.msra.mxu0 %v1584
        %1607 = vmatprep.subr.bf16.mxu0 0
        %1608 = vmatpush1.bf16.msra.mxu0 %v1583
        %1609 = vmatprep.subr.bf16.mxu0 0
        %1610 = vmatpush1.bf16.msra.mxu0 %v1582
        %1611 = vmatprep.subr.bf16.mxu0 0
        %1612 = vmatpush1.bf16.msra.mxu0 %v1581
        %1613 = vmatprep.subr.bf16.mxu0 0
        %1614 = vmatpush2.bf16.msra.mxu0 0
        %1615 = vmatprep.subr.bf16.mxu0 0
        %1616 = vmatpush2.bf16.msra.mxu0 0
        %1617 = vmatprep.subr.bf16.mxu0 0
        %1618 = vmatpush2.bf16.msra.mxu0 0
        %1619 = vmatprep.subr.bf16.mxu0 0
        %1620 = vmatpush2.bf16.msra.mxu0 0
        %1621 = vmatprep.subr.bf16.mxu0 0
        %1622 = vmatpush2.bf16.msra.mxu0 0
        %1623 = vmatprep.subr.bf16.mxu0 0
        %1624 = vmatpush2.bf16.msra.mxu0 0
        %1625 = vmatprep.subr.bf16.mxu0 0
        %1626 = vmatpush2.bf16.msra.mxu0 0
        %1627 = vmatprep.subr.bf16.mxu0 0
        %1628 = vmatpush2.bf16.msra.mxu0 0
        %1629 = vmatprep.mubr.bf16.mxu0 0
        %1630 = vmatmul.mubr.bf16.gmra.mxu0 %v1396
        %v1631 = vpop.f32.mrf.mxu0
        %v1632 = vadd.f32 0.0, %v1631
        %v1633 = vpop.f32.mrf.mxu0
        %v1634 = vpop.f32.mrf.mxu0
        %v1635 = vpop.f32.mrf.mxu0
        %1636 = vdwg.mxu0
        %v1653 = vunpack.c.l.b16 %v1429
        %v1654 = vunpack.c.l.b16 %v1430
        %v1655 = vunpack.c.l.b16 %v1431
        %v1656 = vunpack.c.l.b16 %v1432
        %v1657 = vunpack.c.l.b16 %v1433
        %v1658 = vunpack.c.l.b16 %v1434
        %v1659 = vunpack.c.l.b16 %v1435
        %v1660 = vunpack.c.l.b16 %v1436
        %v1661 = vunpack.c.l.b16 %v1437
        %v1662 = vunpack.c.l.b16 %v1438
        %v1663 = vunpack.c.l.b16 %v1439
        %v1664 = vunpack.c.l.b16 %v1440
        %v1665 = vunpack.c.l.b16 %v1441
        %v1666 = vunpack.c.l.b16 %v1442
        %v1667 = vunpack.c.l.b16 %v1443
        %v1668 = vunpack.c.l.b16 %v1444
        %v1669 = vpack.c.b16 %v1654, %v1653
        %v1670 = vpack.c.b16 %v1656, %v1655
        %v1671 = vpack.c.b16 %v1658, %v1657
        %v1672 = vpack.c.b16 %v1660, %v1659
        %v1673 = vpack.c.b16 %v1662, %v1661
        %v1674 = vpack.c.b16 %v1664, %v1663
        %v1675 = vpack.c.b16 %v1666, %v1665
        %v1676 = vpack.c.b16 %v1668, %v1667
        %1685 = vmatprep.subr.bf16.mxu0 0
        %1686 = vmatpush1.bf16.msra.mxu0 %v1676
        %1687 = vmatprep.subr.bf16.mxu0 0
        %1688 = vmatpush1.bf16.msra.mxu0 %v1675
        %1689 = vmatprep.subr.bf16.mxu0 0
        %1690 = vmatpush1.bf16.msra.mxu0 %v1674
        %1691 = vmatprep.subr.bf16.mxu0 0
        %1692 = vmatpush1.bf16.msra.mxu0 %v1673
        %1693 = vmatprep.subr.bf16.mxu0 0
        %1694 = vmatpush1.bf16.msra.mxu0 %v1672
        %1695 = vmatprep.subr.bf16.mxu0 0
        %1696 = vmatpush1.bf16.msra.mxu0 %v1671
        %1697 = vmatprep.subr.bf16.mxu0 0
        %1698 = vmatpush1.bf16.msra.mxu0 %v1670
        %1699 = vmatprep.subr.bf16.mxu0 0
        %1700 = vmatpush1.bf16.msra.mxu0 %v1669
        %1701 = vmatprep.subr.bf16.mxu0 0
        %1702 = vmatpush2.bf16.msra.mxu0 0
        %1703 = vmatprep.subr.bf16.mxu0 0
        %1704 = vmatpush2.bf16.msra.mxu0 0
        %1705 = vmatprep.subr.bf16.mxu0 0
        %1706 = vmatpush2.bf16.msra.mxu0 0
        %1707 = vmatprep.subr.bf16.mxu0 0
        %1708 = vmatpush2.bf16.msra.mxu0 0
        %1709 = vmatprep.subr.bf16.mxu0 0
        %1710 = vmatpush2.bf16.msra.mxu0 0
        %1711 = vmatprep.subr.bf16.mxu0 0
        %1712 = vmatpush2.bf16.msra.mxu0 0
        %1713 = vmatprep.subr.bf16.mxu0 0
        %1714 = vmatpush2.bf16.msra.mxu0 0
        %1715 = vmatprep.subr.bf16.mxu0 0
        %1716 = vmatpush2.bf16.msra.mxu0 0
        %1717 = vmatprep.mubr.bf16.mxu0 0
        %1718 = vmatmul.mubr.bf16.gmra.mxu0 %v1396
        %v1719 = vpop.f32.mrf.mxu0
        %v1720 = vadd.f32 0.0, %v1719
        %v1721 = vpop.f32.mrf.mxu0
        %v1722 = vpop.f32.mrf.mxu0
        %v1723 = vpop.f32.mrf.mxu0
        %1724 = vdwg.mxu0
        %v1741 = vunpack.c.l.b16 %v1445
        %v1742 = vunpack.c.l.b16 %v1446
        %v1743 = vunpack.c.l.b16 %v1447
        %v1744 = vunpack.c.l.b16 %v1448
        %v1745 = vunpack.c.l.b16 %v1449
        %v1746 = vunpack.c.l.b16 %v1450
        %v1747 = vunpack.c.l.b16 %v1451
        %v1748 = vunpack.c.l.b16 %v1452
        %v1749 = vunpack.c.l.b16 %v1453
        %v1750 = vunpack.c.l.b16 %v1454
        %v1751 = vunpack.c.l.b16 %v1455
        %v1752 = vunpack.c.l.b16 %v1456
        %v1753 = vunpack.c.l.b16 %v1457
        %v1754 = vunpack.c.l.b16 %v1458
        %v1755 = vunpack.c.l.b16 %v1459
        %v1756 = vunpack.c.l.b16 %v1460
        %v1757 = vpack.c.b16 %v1742, %v1741
        %v1758 = vpack.c.b16 %v1744, %v1743
        %v1759 = vpack.c.b16 %v1746, %v1745
        %v1760 = vpack.c.b16 %v1748, %v1747
        %v1761 = vpack.c.b16 %v1750, %v1749
        %v1762 = vpack.c.b16 %v1752, %v1751
        %v1763 = vpack.c.b16 %v1754, %v1753
        %v1764 = vpack.c.b16 %v1756, %v1755
        %1773 = vmatprep.subr.bf16.mxu0 0
        %1774 = vmatpush1.bf16.msra.mxu0 %v1764
        %1775 = vmatprep.subr.bf16.mxu0 0
        %1776 = vmatpush1.bf16.msra.mxu0 %v1763
        %1777 = vmatprep.subr.bf16.mxu0 0
        %1778 = vmatpush1.bf16.msra.mxu0 %v1762
        %1779 = vmatprep.subr.bf16.mxu0 0
        %1780 = vmatpush1.bf16.msra.mxu0 %v1761
        %1781 = vmatprep.subr.bf16.mxu0 0
        %1782 = vmatpush1.bf16.msra.mxu0 %v1760
        %1783 = vmatprep.subr.bf16.mxu0 0
        %1784 = vmatpush1.bf16.msra.mxu0 %v1759
        %1785 = vmatprep.subr.bf16.mxu0 0
        %1786 = vmatpush1.bf16.msra.mxu0 %v1758
        %1787 = vmatprep.subr.bf16.mxu0 0
        %1788 = vmatpush1.bf16.msra.mxu0 %v1757
        %1789 = vmatprep.subr.bf16.mxu0 0
        %1790 = vmatpush2.bf16.msra.mxu0 0
        %1791 = vmatprep.subr.bf16.mxu0 0
        %1792 = vmatpush2.bf16.msra.mxu0 0
        %1793 = vmatprep.subr.bf16.mxu0 0
        %1794 = vmatpush2.bf16.msra.mxu0 0
        %1795 = vmatprep.subr.bf16.mxu0 0
        %1796 = vmatpush2.bf16.msra.mxu0 0
        %1797 = vmatprep.subr.bf16.mxu0 0
        %1798 = vmatpush2.bf16.msra.mxu0 0
        %1799 = vmatprep.subr.bf16.mxu0 0
        %1800 = vmatpush2.bf16.msra.mxu0 0
        %1801 = vmatprep.subr.bf16.mxu0 0
        %1802 = vmatpush2.bf16.msra.mxu0 0
        %1803 = vmatprep.subr.bf16.mxu0 0
        %1804 = vmatpush2.bf16.msra.mxu0 0
        %1805 = vmatprep.mubr.bf16.mxu0 0
        %1806 = vmatmul.mubr.bf16.gmra.mxu0 %v1396
        %v1807 = vpop.f32.mrf.mxu0
        %v1808 = vadd.f32 0.0, %v1807
        %v1809 = vpop.f32.mrf.mxu0
        %v1810 = vpop.f32.mrf.mxu0
        %v1811 = vpop.f32.mrf.mxu0
        %1812 = vdwg.mxu0
        %v1813 = vpack.c.bf16 %v1544, %v1544
        %v1814 = vpack.c.bf16 %v1632, %v1632
        %v1815 = vpack.c.bf16 %v1720, %v1720
        %v1816 = vpack.c.bf16 %v1808, %v1808
        %v1817 = vld [vmem:[#allocation2] sm:$0xf]
        %v1818 = vld [vmem:[#allocation2 + $0x4] sm:$0xf]
        %v1819 = vld [vmem:[#allocation2 + $0x8] sm:$0xf]
        %v1820 = vld [vmem:[#allocation2 + $0xc] sm:$0xf]
        %vm1821 = vcmask 261120
        %v1823 = vsel %vm1821, %v1813, 0
        %v1826 = vsel %vm1821, %v1817, 0
        %1828 = vmatprep.subr.bf16.mxu0 0
        %1829 = vmatpush1.bf16.xpose.msra.mxu0 0
        %1830 = vmatprep.subr.bf16.mxu0 0
        %1831 = vmatpush1.bf16.xpose.msra.mxu0 0
        %1832 = vmatprep.subr.bf16.mxu0 0
        %1833 = vmatpush1.bf16.xpose.msra.mxu0 0
        %1834 = vmatprep.subr.bf16.mxu0 0
        %1835 = vmatpush1.bf16.xpose.msra.mxu0 0
        %1836 = vmatprep.subr.bf16.mxu0 0
        %1837 = vmatpush1.bf16.xpose.msra.mxu0 0
        %1838 = vmatprep.subr.bf16.mxu0 0
        %1839 = vmatpush1.bf16.xpose.msra.mxu0 0
        %1840 = vmatprep.subr.bf16.mxu0 0
        %1841 = vmatpush1.bf16.xpose.msra.mxu0 0
        %1842 = vmatprep.subr.bf16.mxu0 0
        %1843 = vmatpush1.bf16.xpose.msra.mxu0 %v1826
        %1844 = vmatprep.subr.bf16.mxu0 0
        %1845 = vmatpush2.bf16.xpose.msra.mxu0 0
        %1846 = vmatprep.subr.bf16.mxu0 0
        %1847 = vmatpush2.bf16.xpose.msra.mxu0 0
        %1848 = vmatprep.subr.bf16.mxu0 0
        %1849 = vmatpush2.bf16.xpose.msra.mxu0 0
        %1850 = vmatprep.subr.bf16.mxu0 0
        %1851 = vmatpush2.bf16.xpose.msra.mxu0 0
        %1852 = vmatprep.subr.bf16.mxu0 0
        %1853 = vmatpush2.bf16.xpose.msra.mxu0 0
        %1854 = vmatprep.subr.bf16.mxu0 0
        %1855 = vmatpush2.bf16.xpose.msra.mxu0 0
        %1856 = vmatprep.subr.bf16.mxu0 0
        %1857 = vmatpush2.bf16.xpose.msra.mxu0 0
        %1858 = vmatprep.subr.bf16.mxu0 0
        %1859 = vmatpush2.bf16.xpose.msra.mxu0 0
        %1860 = vmatprep.mubr.bf16.mxu0 0
        %1861 = vmatmul.mubr.bf16.gmra.mxu0 %v1823
        %v1862 = vpop.f32.mrf.mxu0
        %v1863 = vadd.f32 0.0, %v1862
        %v1864 = vpop.f32.mrf.mxu0
        %v1865 = vpop.f32.mrf.mxu0
        %v1866 = vpop.f32.mrf.mxu0
        %1867 = vdwg.mxu0
        %v1869 = vsel %vm1821, %v1814, 0
        %v1872 = vsel %vm1821, %v1818, 0
        %1874 = vmatprep.subr.bf16.mxu0 0
        %1875 = vmatpush1.bf16.xpose.msra.mxu0 0
        %1876 = vmatprep.subr.bf16.mxu0 0
        %1877 = vmatpush1.bf16.xpose.msra.mxu0 0
        %1878 = vmatprep.subr.bf16.mxu0 0
        %1879 = vmatpush1.bf16.xpose.msra.mxu0 0
        %1880 = vmatprep.subr.bf16.mxu0 0
        %1881 = vmatpush1.bf16.xpose.msra.mxu0 0
        %1882 = vmatprep.subr.bf16.mxu0 0
        %1883 = vmatpush1.bf16.xpose.msra.mxu0 0
        %1884 = vmatprep.subr.bf16.mxu0 0
        %1885 = vmatpush1.bf16.xpose.msra.mxu0 0
        %1886 = vmatprep.subr.bf16.mxu0 0
        %1887 = vmatpush1.bf16.xpose.msra.mxu0 0
        %1888 = vmatprep.subr.bf16.mxu0 0
        %1889 = vmatpush1.bf16.xpose.msra.mxu0 %v1872
        %1890 = vmatprep.subr.bf16.mxu0 0
        %1891 = vmatpush2.bf16.xpose.msra.mxu0 0
        %1892 = vmatprep.subr.bf16.mxu0 0
        %1893 = vmatpush2.bf16.xpose.msra.mxu0 0
        %1894 = vmatprep.subr.bf16.mxu0 0
        %1895 = vmatpush2.bf16.xpose.msra.mxu0 0
        %1896 = vmatprep.subr.bf16.mxu0 0
        %1897 = vmatpush2.bf16.xpose.msra.mxu0 0
        %1898 = vmatprep.subr.bf16.mxu0 0
        %1899 = vmatpush2.bf16.xpose.msra.mxu0 0
        %1900 = vmatprep.subr.bf16.mxu0 0
        %1901 = vmatpush2.bf16.xpose.msra.mxu0 0
        %1902 = vmatprep.subr.bf16.mxu0 0
        %1903 = vmatpush2.bf16.xpose.msra.mxu0 0
        %1904 = vmatprep.subr.bf16.mxu0 0
        %1905 = vmatpush2.bf16.xpose.msra.mxu0 0
        %1906 = vmatprep.mubr.bf16.mxu0 0
        %1907 = vmatmul.mubr.bf16.gmra.mxu0 %v1869
        %v1908 = vpop.f32.mrf.mxu0
        %v1909 = vadd.f32 0.0, %v1908
        %v1910 = vpop.f32.mrf.mxu0
        %v1911 = vpop.f32.mrf.mxu0
        %v1912 = vpop.f32.mrf.mxu0
        %1913 = vdwg.mxu0
        %v1915 = vsel %vm1821, %v1815, 0
        %v1918 = vsel %vm1821, %v1819, 0
        %1920 = vmatprep.subr.bf16.mxu0 0
        %1921 = vmatpush1.bf16.xpose.msra.mxu0 0
        %1922 = vmatprep.subr.bf16.mxu0 0
        %1923 = vmatpush1.bf16.xpose.msra.mxu0 0
        %1924 = vmatprep.subr.bf16.mxu0 0
        %1925 = vmatpush1.bf16.xpose.msra.mxu0 0
        %1926 = vmatprep.subr.bf16.mxu0 0
        %1927 = vmatpush1.bf16.xpose.msra.mxu0 0
        %1928 = vmatprep.subr.bf16.mxu0 0
        %1929 = vmatpush1.bf16.xpose.msra.mxu0 0
        %1930 = vmatprep.subr.bf16.mxu0 0
        %1931 = vmatpush1.bf16.xpose.msra.mxu0 0
        %1932 = vmatprep.subr.bf16.mxu0 0
        %1933 = vmatpush1.bf16.xpose.msra.mxu0 0
        %1934 = vmatprep.subr.bf16.mxu0 0
        %1935 = vmatpush1.bf16.xpose.msra.mxu0 %v1918
        %1936 = vmatprep.subr.bf16.mxu0 0
        %1937 = vmatpush2.bf16.xpose.msra.mxu0 0
        %1938 = vmatprep.subr.bf16.mxu0 0
        %1939 = vmatpush2.bf16.xpose.msra.mxu0 0
        %1940 = vmatprep.subr.bf16.mxu0 0
        %1941 = vmatpush2.bf16.xpose.msra.mxu0 0
        %1942 = vmatprep.subr.bf16.mxu0 0
        %1943 = vmatpush2.bf16.xpose.msra.mxu0 0
        %1944 = vmatprep.subr.bf16.mxu0 0
        %1945 = vmatpush2.bf16.xpose.msra.mxu0 0
        %1946 = vmatprep.subr.bf16.mxu0 0
        %1947 = vmatpush2.bf16.xpose.msra.mxu0 0
        %1948 = vmatprep.subr.bf16.mxu0 0
        %1949 = vmatpush2.bf16.xpose.msra.mxu0 0
        %1950 = vmatprep.subr.bf16.mxu0 0
        %1951 = vmatpush2.bf16.xpose.msra.mxu0 0
        %1952 = vmatprep.mubr.bf16.mxu0 0
        %1953 = vmatmul.mubr.bf16.gmra.mxu0 %v1915
        %v1954 = vpop.f32.mrf.mxu0
        %v1955 = vadd.f32 0.0, %v1954
        %v1956 = vpop.f32.mrf.mxu0
        %v1957 = vpop.f32.mrf.mxu0
        %v1958 = vpop.f32.mrf.mxu0
        %1959 = vdwg.mxu0
        %v1961 = vsel %vm1821, %v1816, 0
        %v1964 = vsel %vm1821, %v1820, 0
        %1966 = vmatprep.subr.bf16.mxu0 0
        %1967 = vmatpush1.bf16.xpose.msra.mxu0 0
        %1968 = vmatprep.subr.bf16.mxu0 0
        %1969 = vmatpush1.bf16.xpose.msra.mxu0 0
        %1970 = vmatprep.subr.bf16.mxu0 0
        %1971 = vmatpush1.bf16.xpose.msra.mxu0 0
        %1972 = vmatprep.subr.bf16.mxu0 0
        %1973 = vmatpush1.bf16.xpose.msra.mxu0 0
        %1974 = vmatprep.subr.bf16.mxu0 0
        %1975 = vmatpush1.bf16.xpose.msra.mxu0 0
        %1976 = vmatprep.subr.bf16.mxu0 0
        %1977 = vmatpush1.bf16.xpose.msra.mxu0 0
        %1978 = vmatprep.subr.bf16.mxu0 0
        %1979 = vmatpush1.bf16.xpose.msra.mxu0 0
        %1980 = vmatprep.subr.bf16.mxu0 0
        %1981 = vmatpush1.bf16.xpose.msra.mxu0 %v1964
        %1982 = vmatprep.subr.bf16.mxu0 0
        %1983 = vmatpush2.bf16.xpose.msra.mxu0 0
        %1984 = vmatprep.subr.bf16.mxu0 0
        %1985 = vmatpush2.bf16.xpose.msra.mxu0 0
        %1986 = vmatprep.subr.bf16.mxu0 0
        %1987 = vmatpush2.bf16.xpose.msra.mxu0 0
        %1988 = vmatprep.subr.bf16.mxu0 0
        %1989 = vmatpush2.bf16.xpose.msra.mxu0 0
        %1990 = vmatprep.subr.bf16.mxu0 0
        %1991 = vmatpush2.bf16.xpose.msra.mxu0 0
        %1992 = vmatprep.subr.bf16.mxu0 0
        %1993 = vmatpush2.bf16.xpose.msra.mxu0 0
        %1994 = vmatprep.subr.bf16.mxu0 0
        %1995 = vmatpush2.bf16.xpose.msra.mxu0 0
        %1996 = vmatprep.subr.bf16.mxu0 0
        %1997 = vmatpush2.bf16.xpose.msra.mxu0 0
        %1998 = vmatprep.mubr.bf16.mxu0 0
        %1999 = vmatmul.mubr.bf16.gmra.mxu0 %v1961
        %v2000 = vpop.f32.mrf.mxu0
        %v2001 = vadd.f32 0.0, %v2000
        %v2002 = vpop.f32.mrf.mxu0
        %v2003 = vpop.f32.mrf.mxu0
        %v2004 = vpop.f32.mrf.mxu0
        %2005 = vdwg.mxu0
        %v2006 = vmul.f32 %v1863, 0.17677669
        %v2007 = vmul.f32 %v1909, 0.17677669
        %v2008 = vmul.f32 %v1955, 0.17677669
        %v2009 = vmul.f32 %v2001, 0.17677669
        %vm2010 = vcmask 64512
        %v2011 = vsel %vm2010, %v2006, -inf
        %2012 = vmax.xlane.f32.xlu0 %v2011
        %v2013 = vpop.xlane.xlu0 %2012
        %v2014 = vsel %vm2010, %v2007, -inf
        %2015 = vmax.xlane.f32.xlu0 %v2014
        %v2016 = vpop.xlane.xlu0 %2015
        %v2017 = vsel %vm2010, %v2008, -inf
        %2018 = vmax.xlane.f32.xlu0 %v2017
        %v2019 = vpop.xlane.xlu0 %2018
        %v2020 = vsel %vm2010, %v2009, -inf
        %2021 = vmax.xlane.f32.xlu0 %v2020
        %v2022 = vpop.xlane.xlu0 %2021
        %v2023 = vsub.f32 %v2006, %v2013
        %v2024 = vsub.f32 %v2007, %v2016
        %v2025 = vsub.f32 %v2008, %v2019
        %v2026 = vsub.f32 %v2009, %v2022
        %v2027 = vmul.f32 %v2023, 1.442695
        %v2028 = vpow.pop %v2027
        %v2029 = vmul.f32 %v2024, 1.442695
        %v2030 = vpow.pop %v2029
        %v2031 = vmul.f32 %v2025, 1.442695
        %v2032 = vpow.pop %v2031
        %v2033 = vmul.f32 %v2026, 1.442695
        %v2034 = vpow.pop %v2033
        %v2035 = vsel %vm2010, %v2028, 0.0
        %2036 = vadd.xlane.f32.xlu0 %v2035
        %v2037 = vpop.xlane.xlu0 %2036
        %v2038 = vsel %vm2010, %v2030, 0.0
        %2039 = vadd.xlane.f32.xlu0 %v2038
        %v2040 = vpop.xlane.xlu0 %2039
        %v2041 = vsel %vm2010, %v2032, 0.0
        %2042 = vadd.xlane.f32.xlu0 %v2041
        %v2043 = vpop.xlane.xlu0 %2042
        %v2044 = vsel %vm2010, %v2034, 0.0
        %2045 = vadd.xlane.f32.xlu0 %v2044
        %v2046 = vpop.xlane.xlu0 %2045
        %v2047 = vrcp.pop %v2037
        %v2048 = vrcp.pop %v2040
        %v2049 = vrcp.pop %v2043
        %v2050 = vrcp.pop %v2046
        %v2051 = vmul.f32 %v2028, %v2047
        %v2052 = vmul.f32 %v2030, %v2048
        %v2053 = vmul.f32 %v2032, %v2049
        %v2054 = vmul.f32 %v2034, %v2050
        %v2055 = vpack.c.bf16 %v2051, %v2051
        %v2056 = vpack.c.bf16 %v2052, %v2052
        %v2057 = vpack.c.bf16 %v2053, %v2053
        %v2058 = vpack.c.bf16 %v2054, %v2054
        %v2059 = vld [vmem:[#allocation3] sm:$0xf]
        %v2060 = vld [vmem:[#allocation3 + $0x4] sm:$0xf]
        %v2061 = vld [vmem:[#allocation3 + $0x8] sm:$0xf]
        %v2062 = vld [vmem:[#allocation3 + $0xc] sm:$0xf]
        %v2064 = vsel %vm2010, %v2055, 0
        %vm2066 = vcmask 1043456
        %v2068 = vsel %vm2066, %v2059, 0
        %2070 = vmatprep.subr.bf16.mxu0 0
        %2071 = vmatpush1.bf16.msra.mxu0 0
        %2072 = vmatprep.subr.bf16.mxu0 0
        %2073 = vmatpush1.bf16.msra.mxu0 0
        %2074 = vmatprep.subr.bf16.mxu0 0
        %2075 = vmatpush1.bf16.msra.mxu0 0
        %2076 = vmatprep.subr.bf16.mxu0 0
        %2077 = vmatpush1.bf16.msra.mxu0 0
        %2078 = vmatprep.subr.bf16.mxu0 0
        %2079 = vmatpush1.bf16.msra.mxu0 0
        %2080 = vmatprep.subr.bf16.mxu0 0
        %2081 = vmatpush1.bf16.msra.mxu0 0
        %2082 = vmatprep.subr.bf16.mxu0 0
        %2083 = vmatpush1.bf16.msra.mxu0 0
        %2084 = vmatprep.subr.bf16.mxu0 0
        %2085 = vmatpush1.bf16.msra.mxu0 %v2068
        %2086 = vmatprep.subr.bf16.mxu0 0
        %2087 = vmatpush2.bf16.msra.mxu0 0
        %2088 = vmatprep.subr.bf16.mxu0 0
        %2089 = vmatpush2.bf16.msra.mxu0 0
        %2090 = vmatprep.subr.bf16.mxu0 0
        %2091 = vmatpush2.bf16.msra.mxu0 0
        %2092 = vmatprep.subr.bf16.mxu0 0
        %2093 = vmatpush2.bf16.msra.mxu0 0
        %2094 = vmatprep.subr.bf16.mxu0 0
        %2095 = vmatpush2.bf16.msra.mxu0 0
        %2096 = vmatprep.subr.bf16.mxu0 0
        %2097 = vmatpush2.bf16.msra.mxu0 0
        %2098 = vmatprep.subr.bf16.mxu0 0
        %2099 = vmatpush2.bf16.msra.mxu0 0
        %2100 = vmatprep.subr.bf16.mxu0 0
        %2101 = vmatpush2.bf16.msra.mxu0 0
        %2102 = vmatprep.mubr.bf16.mxu0 0
        %2103 = vmatmul.mubr.bf16.gmra.mxu0 %v2064
        %v2104 = vpop.f32.mrf.mxu0
        %v2105 = vadd.f32 0.0, %v2104
        %v2106 = vpop.f32.mrf.mxu0
        %v2107 = vpop.f32.mrf.mxu0
        %v2108 = vpop.f32.mrf.mxu0
        %2109 = vdwg.mxu0
        %v2111 = vsel %vm2010, %v2056, 0
        %v2114 = vsel %vm2066, %v2060, 0
        %2116 = vmatprep.subr.bf16.mxu0 0
        %2117 = vmatpush1.bf16.msra.mxu0 0
        %2118 = vmatprep.subr.bf16.mxu0 0
        %2119 = vmatpush1.bf16.msra.mxu0 0
        %2120 = vmatprep.subr.bf16.mxu0 0
        %2121 = vmatpush1.bf16.msra.mxu0 0
        %2122 = vmatprep.subr.bf16.mxu0 0
        %2123 = vmatpush1.bf16.msra.mxu0 0
        %2124 = vmatprep.subr.bf16.mxu0 0
        %2125 = vmatpush1.bf16.msra.mxu0 0
        %2126 = vmatprep.subr.bf16.mxu0 0
        %2127 = vmatpush1.bf16.msra.mxu0 0
        %2128 = vmatprep.subr.bf16.mxu0 0
        %2129 = vmatpush1.bf16.msra.mxu0 0
        %2130 = vmatprep.subr.bf16.mxu0 0
        %2131 = vmatpush1.bf16.msra.mxu0 %v2114
        %2132 = vmatprep.subr.bf16.mxu0 0
        %2133 = vmatpush2.bf16.msra.mxu0 0
        %2134 = vmatprep.subr.bf16.mxu0 0
        %2135 = vmatpush2.bf16.msra.mxu0 0
        %2136 = vmatprep.subr.bf16.mxu0 0
        %2137 = vmatpush2.bf16.msra.mxu0 0
        %2138 = vmatprep.subr.bf16.mxu0 0
        %2139 = vmatpush2.bf16.msra.mxu0 0
        %2140 = vmatprep.subr.bf16.mxu0 0
        %2141 = vmatpush2.bf16.msra.mxu0 0
        %2142 = vmatprep.subr.bf16.mxu0 0
        %2143 = vmatpush2.bf16.msra.mxu0 0
        %2144 = vmatprep.subr.bf16.mxu0 0
        %2145 = vmatpush2.bf16.msra.mxu0 0
        %2146 = vmatprep.subr.bf16.mxu0 0
        %2147 = vmatpush2.bf16.msra.mxu0 0
        %2148 = vmatprep.mubr.bf16.mxu0 0
        %2149 = vmatmul.mubr.bf16.gmra.mxu0 %v2111
        %v2150 = vpop.f32.mrf.mxu0
        %v2151 = vadd.f32 0.0, %v2150
        %v2152 = vpop.f32.mrf.mxu0
        %v2153 = vpop.f32.mrf.mxu0
        %v2154 = vpop.f32.mrf.mxu0
        %2155 = vdwg.mxu0
        %v2157 = vsel %vm2010, %v2057, 0
        %v2160 = vsel %vm2066, %v2061, 0
        %2162 = vmatprep.subr.bf16.mxu0 0
        %2163 = vmatpush1.bf16.msra.mxu0 0
        %2164 = vmatprep.subr.bf16.mxu0 0
        %2165 = vmatpush1.bf16.msra.mxu0 0
        %2166 = vmatprep.subr.bf16.mxu0 0
        %2167 = vmatpush1.bf16.msra.mxu0 0
        %2168 = vmatprep.subr.bf16.mxu0 0
        %2169 = vmatpush1.bf16.msra.mxu0 0
        %2170 = vmatprep.subr.bf16.mxu0 0
        %2171 = vmatpush1.bf16.msra.mxu0 0
        %2172 = vmatprep.subr.bf16.mxu0 0
        %2173 = vmatpush1.bf16.msra.mxu0 0
        %2174 = vmatprep.subr.bf16.mxu0 0
        %2175 = vmatpush1.bf16.msra.mxu0 0
        %2176 = vmatprep.subr.bf16.mxu0 0
        %2177 = vmatpush1.bf16.msra.mxu0 %v2160
        %2178 = vmatprep.subr.bf16.mxu0 0
        %2179 = vmatpush2.bf16.msra.mxu0 0
        %2180 = vmatprep.subr.bf16.mxu0 0
        %2181 = vmatpush2.bf16.msra.mxu0 0
        %2182 = vmatprep.subr.bf16.mxu0 0
        %2183 = vmatpush2.bf16.msra.mxu0 0
        %2184 = vmatprep.subr.bf16.mxu0 0
        %2185 = vmatpush2.bf16.msra.mxu0 0
        %2186 = vmatprep.subr.bf16.mxu0 0
        %2187 = vmatpush2.bf16.msra.mxu0 0
        %2188 = vmatprep.subr.bf16.mxu0 0
        %2189 = vmatpush2.bf16.msra.mxu0 0
        %2190 = vmatprep.subr.bf16.mxu0 0
        %2191 = vmatpush2.bf16.msra.mxu0 0
        %2192 = vmatprep.subr.bf16.mxu0 0
        %2193 = vmatpush2.bf16.msra.mxu0 0
        %2194 = vmatprep.mubr.bf16.mxu0 0
        %2195 = vmatmul.mubr.bf16.gmra.mxu0 %v2157
        %v2196 = vpop.f32.mrf.mxu0
        %v2197 = vadd.f32 0.0, %v2196
        %v2198 = vpop.f32.mrf.mxu0
        %v2199 = vpop.f32.mrf.mxu0
        %v2200 = vpop.f32.mrf.mxu0
        %2201 = vdwg.mxu0
        %v2203 = vsel %vm2010, %v2058, 0
        %v2206 = vsel %vm2066, %v2062, 0
        %2208 = vmatprep.subr.bf16.mxu0 0
        %2209 = vmatpush1.bf16.msra.mxu0 0
        %2210 = vmatprep.subr.bf16.mxu0 0
        %2211 = vmatpush1.bf16.msra.mxu0 0
        %2212 = vmatprep.subr.bf16.mxu0 0
        %2213 = vmatpush1.bf16.msra.mxu0 0
        %2214 = vmatprep.subr.bf16.mxu0 0
        %2215 = vmatpush1.bf16.msra.mxu0 0
        %2216 = vmatprep.subr.bf16.mxu0 0
        %2217 = vmatpush1.bf16.msra.mxu0 0
        %2218 = vmatprep.subr.bf16.mxu0 0
        %2219 = vmatpush1.bf16.msra.mxu0 0
        %2220 = vmatprep.subr.bf16.mxu0 0
        %2221 = vmatpush1.bf16.msra.mxu0 0
        %2222 = vmatprep.subr.bf16.mxu0 0
        %2223 = vmatpush1.bf16.msra.mxu0 %v2206
        %2224 = vmatprep.subr.bf16.mxu0 0
        %2225 = vmatpush2.bf16.msra.mxu0 0
        %2226 = vmatprep.subr.bf16.mxu0 0
        %2227 = vmatpush2.bf16.msra.mxu0 0
        %2228 = vmatprep.subr.bf16.mxu0 0
        %2229 = vmatpush2.bf16.msra.mxu0 0
        %2230 = vmatprep.subr.bf16.mxu0 0
        %2231 = vmatpush2.bf16.msra.mxu0 0
        %2232 = vmatprep.subr.bf16.mxu0 0
        %2233 = vmatpush2.bf16.msra.mxu0 0
        %2234 = vmatprep.subr.bf16.mxu0 0
        %2235 = vmatpush2.bf16.msra.mxu0 0
        %2236 = vmatprep.subr.bf16.mxu0 0
        %2237 = vmatpush2.bf16.msra.mxu0 0
        %2238 = vmatprep.subr.bf16.mxu0 0
        %2239 = vmatpush2.bf16.msra.mxu0 0
        %2240 = vmatprep.mubr.bf16.mxu0 0
        %2241 = vmatmul.mubr.bf16.gmra.mxu0 %v2203
        %v2242 = vpop.f32.mrf.mxu0
        %v2243 = vadd.f32 0.0, %v2242
        %v2244 = vpop.f32.mrf.mxu0
        %v2245 = vpop.f32.mrf.mxu0
        %v2246 = vpop.f32.mrf.mxu0
        %2247 = vdwg.mxu0
        %v2248 = vpack.c.bf16 %v2105, %v2105
        %v2249 = vpack.c.bf16 %v2151, %v2151
        %v2250 = vpack.c.bf16 %v2197, %v2197
        %v2251 = vpack.c.bf16 %v2243, %v2243
        %v2252 = vld [vmem:[%s5] sm:$0xf]
        %v2253 = vld [vmem:[%s5 + $0x4] sm:$0xf]
        %v2254 = vld [vmem:[%s5 + $0x8] sm:$0xf]
        %v2255 = vld [vmem:[%s5 + $0xc] sm:$0xf]
        %v2256 = vld [vmem:[%s5 + $0x10] sm:$0xf]
        %v2257 = vld [vmem:[%s5 + $0x14] sm:$0xf]
        %v2258 = vld [vmem:[%s5 + $0x18] sm:$0xf]
        %v2259 = vld [vmem:[%s5 + $0x1c] sm:$0xf]
        %v2260 = vld [vmem:[%s5 + $0x20] sm:$0xf]
        %v2261 = vld [vmem:[%s5 + $0x24] sm:$0xf]
        %v2262 = vld [vmem:[%s5 + $0x28] sm:$0xf]
        %v2263 = vld [vmem:[%s5 + $0x2c] sm:$0xf]
        %v2264 = vld [vmem:[%s5 + $0x30] sm:$0xf]
        %v2265 = vld [vmem:[%s5 + $0x34] sm:$0xf]
        %v2266 = vld [vmem:[%s5 + $0x38] sm:$0xf]
        %v2267 = vld [vmem:[%s5 + $0x3c] sm:$0xf]
        %v2272 = vunpack.c.l.b16 %v2252
        %v2273 = vunpack.c.l.b16 %v2253
        %v2274 = vunpack.c.l.b16 %v2254
        %v2275 = vunpack.c.l.b16 %v2255
        %v2276 = vpack.c.b16 %v2273, %v2272
        %v2277 = vpack.c.b16 %v2275, %v2274
        %v2281 = vsel %vm1821, %v2248, 0
        %2283 = vmatprep.subr.bf16.mxu0 0
        %2284 = vmatpush1.bf16.msra.mxu0 0
        %2285 = vmatprep.subr.bf16.mxu0 0
        %2286 = vmatpush1.bf16.msra.mxu0 0
        %2287 = vmatprep.subr.bf16.mxu0 0
        %2288 = vmatpush1.bf16.msra.mxu0 0
        %2289 = vmatprep.subr.bf16.mxu0 0
        %2290 = vmatpush1.bf16.msra.mxu0 0
        %2291 = vmatprep.subr.bf16.mxu0 0
        %2292 = vmatpush1.bf16.msra.mxu0 0
        %2293 = vmatprep.subr.bf16.mxu0 0
        %2294 = vmatpush1.bf16.msra.mxu0 0
        %2295 = vmatprep.subr.bf16.mxu0 0
        %2296 = vmatpush1.bf16.msra.mxu0 %v2277
        %2297 = vmatprep.subr.bf16.mxu0 0
        %2298 = vmatpush1.bf16.msra.mxu0 %v2276
        %2299 = vmatprep.subr.bf16.mxu0 0
        %2300 = vmatpush2.bf16.msra.mxu0 0
        %2301 = vmatprep.subr.bf16.mxu0 0
        %2302 = vmatpush2.bf16.msra.mxu0 0
        %2303 = vmatprep.subr.bf16.mxu0 0
        %2304 = vmatpush2.bf16.msra.mxu0 0
        %2305 = vmatprep.subr.bf16.mxu0 0
        %2306 = vmatpush2.bf16.msra.mxu0 0
        %2307 = vmatprep.subr.bf16.mxu0 0
        %2308 = vmatpush2.bf16.msra.mxu0 0
        %2309 = vmatprep.subr.bf16.mxu0 0
        %2310 = vmatpush2.bf16.msra.mxu0 0
        %2311 = vmatprep.subr.bf16.mxu0 0
        %2312 = vmatpush2.bf16.msra.mxu0 0
        %2313 = vmatprep.subr.bf16.mxu0 0
        %2314 = vmatpush2.bf16.msra.mxu0 0
        %2315 = vmatprep.mubr.bf16.mxu0 0
        %2316 = vmatmul.mubr.bf16.gmra.mxu0 %v2281
        %v2317 = vpop.f32.mrf.mxu0
        %v2318 = vadd.f32 0.0, %v2317
        %v2319 = vpop.f32.mrf.mxu0
        %v2320 = vpop.f32.mrf.mxu0
        %v2321 = vpop.f32.mrf.mxu0
        %2322 = vdwg.mxu0
        %v2327 = vunpack.c.l.b16 %v2256
        %v2328 = vunpack.c.l.b16 %v2257
        %v2329 = vunpack.c.l.b16 %v2258
        %v2330 = vunpack.c.l.b16 %v2259
        %v2331 = vpack.c.b16 %v2328, %v2327
        %v2332 = vpack.c.b16 %v2330, %v2329
        %v2336 = vsel %vm1821, %v2249, 0
        %2338 = vmatprep.subr.bf16.mxu0 0
        %2339 = vmatpush1.bf16.msra.mxu0 0
        %2340 = vmatprep.subr.bf16.mxu0 0
        %2341 = vmatpush1.bf16.msra.mxu0 0
        %2342 = vmatprep.subr.bf16.mxu0 0
        %2343 = vmatpush1.bf16.msra.mxu0 0
        %2344 = vmatprep.subr.bf16.mxu0 0
        %2345 = vmatpush1.bf16.msra.mxu0 0
        %2346 = vmatprep.subr.bf16.mxu0 0
        %2347 = vmatpush1.bf16.msra.mxu0 0
        %2348 = vmatprep.subr.bf16.mxu0 0
        %2349 = vmatpush1.bf16.msra.mxu0 0
        %2350 = vmatprep.subr.bf16.mxu0 0
        %2351 = vmatpush1.bf16.msra.mxu0 %v2332
        %2352 = vmatprep.subr.bf16.mxu0 0
        %2353 = vmatpush1.bf16.msra.mxu0 %v2331
        %2354 = vmatprep.subr.bf16.mxu0 0
        %2355 = vmatpush2.bf16.msra.mxu0 0
        %2356 = vmatprep.subr.bf16.mxu0 0
        %2357 = vmatpush2.bf16.msra.mxu0 0
        %2358 = vmatprep.subr.bf16.mxu0 0
        %2359 = vmatpush2.bf16.msra.mxu0 0
        %2360 = vmatprep.subr.bf16.mxu0 0
        %2361 = vmatpush2.bf16.msra.mxu0 0
        %2362 = vmatprep.subr.bf16.mxu0 0
        %2363 = vmatpush2.bf16.msra.mxu0 0
        %2364 = vmatprep.subr.bf16.mxu0 0
        %2365 = vmatpush2.bf16.msra.mxu0 0
        %2366 = vmatprep.subr.bf16.mxu0 0
        %2367 = vmatpush2.bf16.msra.mxu0 0
        %2368 = vmatprep.subr.bf16.mxu0 0
        %2369 = vmatpush2.bf16.msra.mxu0 0
        %2370 = vmatprep.mubr.bf16.mxu0 0
        %2371 = vmatmul.mubr.bf16.gmra.mxu0 %v2336
        %v2372 = vpop.f32.mrf.mxu0
        %v2373 = vadd.f32 0.0, %v2372
        %v2374 = vpop.f32.mrf.mxu0
        %v2375 = vpop.f32.mrf.mxu0
        %v2376 = vpop.f32.mrf.mxu0
        %2377 = vdwg.mxu0
        %v2382 = vunpack.c.l.b16 %v2260
        %v2383 = vunpack.c.l.b16 %v2261
        %v2384 = vunpack.c.l.b16 %v2262
        %v2385 = vunpack.c.l.b16 %v2263
        %v2386 = vpack.c.b16 %v2383, %v2382
        %v2387 = vpack.c.b16 %v2385, %v2384
        %v2391 = vsel %vm1821, %v2250, 0
        %2393 = vmatprep.subr.bf16.mxu0 0
        %2394 = vmatpush1.bf16.msra.mxu0 0
        %2395 = vmatprep.subr.bf16.mxu0 0
        %2396 = vmatpush1.bf16.msra.mxu0 0
        %2397 = vmatprep.subr.bf16.mxu0 0
        %2398 = vmatpush1.bf16.msra.mxu0 0
        %2399 = vmatprep.subr.bf16.mxu0 0
        %2400 = vmatpush1.bf16.msra.mxu0 0
        %2401 = vmatprep.subr.bf16.mxu0 0
        %2402 = vmatpush1.bf16.msra.mxu0 0
        %2403 = vmatprep.subr.bf16.mxu0 0
        %2404 = vmatpush1.bf16.msra.mxu0 0
        %2405 = vmatprep.subr.bf16.mxu0 0
        %2406 = vmatpush1.bf16.msra.mxu0 %v2387
        %2407 = vmatprep.subr.bf16.mxu0 0
        %2408 = vmatpush1.bf16.msra.mxu0 %v2386
        %2409 = vmatprep.subr.bf16.mxu0 0
        %2410 = vmatpush2.bf16.msra.mxu0 0
        %2411 = vmatprep.subr.bf16.mxu0 0
        %2412 = vmatpush2.bf16.msra.mxu0 0
        %2413 = vmatprep.subr.bf16.mxu0 0
        %2414 = vmatpush2.bf16.msra.mxu0 0
        %2415 = vmatprep.subr.bf16.mxu0 0
        %2416 = vmatpush2.bf16.msra.mxu0 0
        %2417 = vmatprep.subr.bf16.mxu0 0
        %2418 = vmatpush2.bf16.msra.mxu0 0
        %2419 = vmatprep.subr.bf16.mxu0 0
        %2420 = vmatpush2.bf16.msra.mxu0 0
        %2421 = vmatprep.subr.bf16.mxu0 0
        %2422 = vmatpush2.bf16.msra.mxu0 0
        %2423 = vmatprep.subr.bf16.mxu0 0
        %2424 = vmatpush2.bf16.msra.mxu0 0
        %2425 = vmatprep.mubr.bf16.mxu0 0
        %2426 = vmatmul.mubr.bf16.gmra.mxu0 %v2391
        %v2427 = vpop.f32.mrf.mxu0
        %v2428 = vadd.f32 0.0, %v2427
        %v2429 = vpop.f32.mrf.mxu0
        %v2430 = vpop.f32.mrf.mxu0
        %v2431 = vpop.f32.mrf.mxu0
        %2432 = vdwg.mxu0
        %v2437 = vunpack.c.l.b16 %v2264
        %v2438 = vunpack.c.l.b16 %v2265
        %v2439 = vunpack.c.l.b16 %v2266
        %v2440 = vunpack.c.l.b16 %v2267
        %v2441 = vpack.c.b16 %v2438, %v2437
        %v2442 = vpack.c.b16 %v2440, %v2439
        %v2446 = vsel %vm1821, %v2251, 0
        %2448 = vmatprep.subr.bf16.mxu0 0
        %2449 = vmatpush1.bf16.msra.mxu0 0
        %2450 = vmatprep.subr.bf16.mxu0 0
        %2451 = vmatpush1.bf16.msra.mxu0 0
        %2452 = vmatprep.subr.bf16.mxu0 0
        %2453 = vmatpush1.bf16.msra.mxu0 0
        %2454 = vmatprep.subr.bf16.mxu0 0
        %2455 = vmatpush1.bf16.msra.mxu0 0
        %2456 = vmatprep.subr.bf16.mxu0 0
        %2457 = vmatpush1.bf16.msra.mxu0 0
        %2458 = vmatprep.subr.bf16.mxu0 0
        %2459 = vmatpush1.bf16.msra.mxu0 0
        %2460 = vmatprep.subr.bf16.mxu0 0
        %2461 = vmatpush1.bf16.msra.mxu0 %v2442
        %2462 = vmatprep.subr.bf16.mxu0 0
        %2463 = vmatpush1.bf16.msra.mxu0 %v2441
        %2464 = vmatprep.subr.bf16.mxu0 0
        %2465 = vmatpush2.bf16.msra.mxu0 0
        %2466 = vmatprep.subr.bf16.mxu0 0
        %2467 = vmatpush2.bf16.msra.mxu0 0
        %2468 = vmatprep.subr.bf16.mxu0 0
        %2469 = vmatpush2.bf16.msra.mxu0 0
        %2470 = vmatprep.subr.bf16.mxu0 0
        %2471 = vmatpush2.bf16.msra.mxu0 0
        %2472 = vmatprep.subr.bf16.mxu0 0
        %2473 = vmatpush2.bf16.msra.mxu0 0
        %2474 = vmatprep.subr.bf16.mxu0 0
        %2475 = vmatpush2.bf16.msra.mxu0 0
        %2476 = vmatprep.subr.bf16.mxu0 0
        %2477 = vmatpush2.bf16.msra.mxu0 0
        %2478 = vmatprep.subr.bf16.mxu0 0
        %2479 = vmatpush2.bf16.msra.mxu0 0
        %2480 = vmatprep.mubr.bf16.mxu0 0
        %2481 = vmatmul.mubr.bf16.gmra.mxu0 %v2446
        %v2482 = vpop.f32.mrf.mxu0
        %v2483 = vadd.f32 0.0, %v2482
        %v2484 = vpop.f32.mrf.mxu0
        %v2485 = vpop.f32.mrf.mxu0
        %v2486 = vpop.f32.mrf.mxu0
        %2487 = vdwg.mxu0
        %v2488 = vadd.f32 %v2318, %v2373
        %v2489 = vadd.f32 %v2488, %v2428
        %v2490 = vadd.f32 %v2489, %v2483
        %v2492 = vlaneseq
        %v2493 = vshrl.u32 %v2492, 7
        %v2494 = vsub.s32 0, %v2493
        %v2495 = vrot.slane %v533, %v2494
        %v2497 = vadd.f32 %v2490, %v2495
        %v2498 = vadd.f32 %v1395, %v2497
        %2499 = vadd.xlane.f32.xlu0 %v2498
        %v2500 = vpop.xlane.xlu0 %2499
        %v2501 = vrcp.pop 128.0
        %v2502 = vmul.f32 %v2500, %v2501
        %v2503 = vsub.f32 %v2498, %v2502
        %v2504 = vmul.f32 %v2503, %v2503
        %2505 = vadd.xlane.f32.xlu0 %v2504
        %v2506 = vpop.xlane.xlu0 %2505
        %v2507 = vmul.f32 %v2506, %v2501
        %v2508 = vadd.f32 %v2507, 1e-05
        %v2509 = vrsqrt.pop %v2508
        %v2510 = vmul.f32 %v2503, %v2509
        %v2512 = vlaneseq
        %v2513 = vshrl.u32 %v2512, 7
        %v2514 = vsub.s32 0, %v2513
        %v2515 = vrot.slane %v534, %v2514
        %v2517 = vmul.f32 %v2510, %v2515
        %v2519 = vlaneseq
        %v2520 = vshrl.u32 %v2519, 7
        %v2521 = vsub.s32 0, %v2520
        %v2522 = vrot.slane %v535, %v2521
        %v2524 = vadd.f32 %v2517, %v2522
        %v2525 = vpack.c.bf16 %v2524, %v2524
        %v2526 = vld [vmem:[%s9] sm:$0xff]
        %v2527 = vld [vmem:[%s9 + $0x8] sm:$0xff]
        %v2528 = vld [vmem:[%s9 + $0x10] sm:$0xff]
        %v2529 = vld [vmem:[%s9 + $0x18] sm:$0xff]
        %v2530 = vld [vmem:[%s9 + $0x20] sm:$0xff]
        %v2531 = vld [vmem:[%s9 + $0x28] sm:$0xff]
        %v2532 = vld [vmem:[%s9 + $0x30] sm:$0xff]
        %v2533 = vld [vmem:[%s9 + $0x38] sm:$0xff]
        %v2534 = vld [vmem:[%s9 + $0x40] sm:$0xff]
        %v2535 = vld [vmem:[%s9 + $0x48] sm:$0xff]
        %v2536 = vld [vmem:[%s9 + $0x50] sm:$0xff]
        %v2537 = vld [vmem:[%s9 + $0x58] sm:$0xff]
        %v2538 = vld [vmem:[%s9 + $0x60] sm:$0xff]
        %v2539 = vld [vmem:[%s9 + $0x68] sm:$0xff]
        %v2540 = vld [vmem:[%s9 + $0x70] sm:$0xff]
        %v2541 = vld [vmem:[%s9 + $0x78] sm:$0xff]
        %v2543 = vlaneseq
        %v2544 = vshrl.u32 %v2543, 7
        %v2545 = vsub.s32 0, %v2544
        %v2546 = vrot.slane %v536, %v2545
        %v2547 = vlaneseq
        %v2548 = vshrl.u32 %v2547, 7
        %v2549 = vsub.s32 1, %v2548
        %v2550 = vrot.slane %v536, %v2549
        %v2569 = vunpack.c.l.b16 %v2526
        %v2570 = vunpack.c.h.b16 %v2526
        %v2571 = vunpack.c.l.b16 %v2527
        %v2572 = vunpack.c.h.b16 %v2527
        %v2573 = vunpack.c.l.b16 %v2528
        %v2574 = vunpack.c.h.b16 %v2528
        %v2575 = vunpack.c.l.b16 %v2529
        %v2576 = vunpack.c.h.b16 %v2529
        %v2577 = vunpack.c.l.b16 %v2530
        %v2578 = vunpack.c.h.b16 %v2530
        %v2579 = vunpack.c.l.b16 %v2531
        %v2580 = vunpack.c.h.b16 %v2531
        %v2581 = vunpack.c.l.b16 %v2532
        %v2582 = vunpack.c.h.b16 %v2532
        %v2583 = vunpack.c.l.b16 %v2533
        %v2584 = vunpack.c.h.b16 %v2533
        %v2585 = vunpack.c.l.b16 %v2534
        %v2586 = vunpack.c.h.b16 %v2534
        %v2587 = vunpack.c.l.b16 %v2535
        %v2588 = vunpack.c.h.b16 %v2535
        %v2589 = vunpack.c.l.b16 %v2536
        %v2590 = vunpack.c.h.b16 %v2536
        %v2591 = vunpack.c.l.b16 %v2537
        %v2592 = vunpack.c.h.b16 %v2537
        %v2593 = vunpack.c.l.b16 %v2538
        %v2594 = vunpack.c.h.b16 %v2538
        %v2595 = vunpack.c.l.b16 %v2539
        %v2596 = vunpack.c.h.b16 %v2539
        %v2597 = vunpack.c.l.b16 %v2540
        %v2598 = vunpack.c.h.b16 %v2540
        %v2599 = vunpack.c.l.b16 %v2541
        %v2600 = vunpack.c.h.b16 %v2541
        %v2601 = vpack.c.b16 %v2571, %v2569
        %v2602 = vpack.c.b16 %v2572, %v2570
        %v2603 = vpack.c.b16 %v2575, %v2573
        %v2604 = vpack.c.b16 %v2576, %v2574
        %v2605 = vpack.c.b16 %v2579, %v2577
        %v2606 = vpack.c.b16 %v2580, %v2578
        %v2607 = vpack.c.b16 %v2583, %v2581
        %v2608 = vpack.c.b16 %v2584, %v2582
        %v2609 = vpack.c.b16 %v2587, %v2585
        %v2610 = vpack.c.b16 %v2588, %v2586
        %v2611 = vpack.c.b16 %v2591, %v2589
        %v2612 = vpack.c.b16 %v2592, %v2590
        %v2613 = vpack.c.b16 %v2595, %v2593
        %v2614 = vpack.c.b16 %v2596, %v2594
        %v2615 = vpack.c.b16 %v2599, %v2597
        %v2616 = vpack.c.b16 %v2600, %v2598
        %2633 = vmatprep.subr.bf16.mxu0 %v2616
        %2634 = vmatpush1.bf16.msra.mxu0 %v2615
        %2635 = vmatprep.subr.bf16.mxu0 %v2614
        %2636 = vmatpush1.bf16.msra.mxu0 %v2613
        %2637 = vmatprep.subr.bf16.mxu0 %v2612
        %2638 = vmatpush1.bf16.msra.mxu0 %v2611
        %2639 = vmatprep.subr.bf16.mxu0 %v2610
        %2640 = vmatpush1.bf16.msra.mxu0 %v2609
        %2641 = vmatprep.subr.bf16.mxu0 %v2608
        %2642 = vmatpush1.bf16.msra.mxu0 %v2607
        %2643 = vmatprep.subr.bf16.mxu0 %v2606
        %2644 = vmatpush1.bf16.msra.mxu0 %v2605
        %2645 = vmatprep.subr.bf16.mxu0 %v2604
        %2646 = vmatpush1.bf16.msra.mxu0 %v2603
        %2647 = vmatprep.subr.bf16.mxu0 %v2602
        %2648 = vmatpush1.bf16.msra.mxu0 %v2601
        %2649 = vmatprep.subr.bf16.mxu0 0
        %2650 = vmatpush2.bf16.msra.mxu0 0
        %2651 = vmatprep.subr.bf16.mxu0 0
        %2652 = vmatpush2.bf16.msra.mxu0 0
        %2653 = vmatprep.subr.bf16.mxu0 0
        %2654 = vmatpush2.bf16.msra.mxu0 0
        %2655 = vmatprep.subr.bf16.mxu0 0
        %2656 = vmatpush2.bf16.msra.mxu0 0
        %2657 = vmatprep.subr.bf16.mxu0 0
        %2658 = vmatpush2.bf16.msra.mxu0 0
        %2659 = vmatprep.subr.bf16.mxu0 0
        %2660 = vmatpush2.bf16.msra.mxu0 0
        %2661 = vmatprep.subr.bf16.mxu0 0
        %2662 = vmatpush2.bf16.msra.mxu0 0
        %2663 = vmatprep.subr.bf16.mxu0 0
        %2664 = vmatpush2.bf16.msra.mxu0 0
        %2665 = vmatprep.mubr.bf16.mxu0 0
        %2666 = vmatmul.mubr.bf16.gmra.mxu0 %v2525
        %v2667 = vpop.f32.mrf.mxu0
        %v2668 = vadd.f32 %v2546, %v2667
        %v2669 = vpop.f32.mrf.mxu0
        %v2670 = vadd.f32 %v2550, %v2669
        %v2671 = vpop.f32.mrf.mxu0
        %v2672 = vpop.f32.mrf.mxu0
        %2673 = vdwg.mxu0
        %v2674 = vmul.f32 %v2668, 0.5
        %v2675 = vmul.f32 %v2670, 0.5
        %v2676 = vmul.f32 %v2668, 0.70710677
        %v2677 = vmul.f32 %v2670, 0.70710677
        %v2678 = verf.f32.pop %v2676
        %v2679 = verf.f32.pop %v2677
        %v2680 = vadd.f32 %v2678, 1.0
        %v2681 = vadd.f32 %v2679, 1.0
        %v2682 = vmul.f32 %v2674, %v2680
        %v2683 = vmul.f32 %v2675, %v2681
        %v2684 = vpack.c.bf16 %v2682, %v2682
        %v2685 = vpack.c.bf16 %v2683, %v2683
        %v2686 = vld [vmem:[%s11] sm:$0xf]
        %v2687 = vld [vmem:[%s11 + $0x4] sm:$0xf]
        %v2688 = vld [vmem:[%s11 + $0x8] sm:$0xf]
        %v2689 = vld [vmem:[%s11 + $0xc] sm:$0xf]
        %v2690 = vld [vmem:[%s11 + $0x10] sm:$0xf]
        %v2691 = vld [vmem:[%s11 + $0x14] sm:$0xf]
        %v2692 = vld [vmem:[%s11 + $0x18] sm:$0xf]
        %v2693 = vld [vmem:[%s11 + $0x1c] sm:$0xf]
        %v2694 = vld [vmem:[%s11 + $0x20] sm:$0xf]
        %v2695 = vld [vmem:[%s11 + $0x24] sm:$0xf]
        %v2696 = vld [vmem:[%s11 + $0x28] sm:$0xf]
        %v2697 = vld [vmem:[%s11 + $0x2c] sm:$0xf]
        %v2698 = vld [vmem:[%s11 + $0x30] sm:$0xf]
        %v2699 = vld [vmem:[%s11 + $0x34] sm:$0xf]
        %v2700 = vld [vmem:[%s11 + $0x38] sm:$0xf]
        %v2701 = vld [vmem:[%s11 + $0x3c] sm:$0xf]
        %v2702 = vld [vmem:[%s11 + $0x40] sm:$0xf]
        %v2703 = vld [vmem:[%s11 + $0x44] sm:$0xf]
        %v2704 = vld [vmem:[%s11 + $0x48] sm:$0xf]
        %v2705 = vld [vmem:[%s11 + $0x4c] sm:$0xf]
        %v2706 = vld [vmem:[%s11 + $0x50] sm:$0xf]
        %v2707 = vld [vmem:[%s11 + $0x54] sm:$0xf]
        %v2708 = vld [vmem:[%s11 + $0x58] sm:$0xf]
        %v2709 = vld [vmem:[%s11 + $0x5c] sm:$0xf]
        %v2710 = vld [vmem:[%s11 + $0x60] sm:$0xf]
        %v2711 = vld [vmem:[%s11 + $0x64] sm:$0xf]
        %v2712 = vld [vmem:[%s11 + $0x68] sm:$0xf]
        %v2713 = vld [vmem:[%s11 + $0x6c] sm:$0xf]
        %v2714 = vld [vmem:[%s11 + $0x70] sm:$0xf]
        %v2715 = vld [vmem:[%s11 + $0x74] sm:$0xf]
        %v2716 = vld [vmem:[%s11 + $0x78] sm:$0xf]
        %v2717 = vld [vmem:[%s11 + $0x7c] sm:$0xf]
        %v2719 = vlaneseq
        %v2720 = vshrl.u32 %v2719, 7
        %v2721 = vsub.s32 0, %v2720
        %v2722 = vrot.slane %v537, %v2721
        %v2756 = vunpack.c.l.b16 %v2686
        %v2757 = vunpack.c.l.b16 %v2687
        %v2758 = vunpack.c.l.b16 %v2688
        %v2759 = vunpack.c.l.b16 %v2689
        %v2760 = vunpack.c.l.b16 %v2690
        %v2761 = vunpack.c.l.b16 %v2691
        %v2762 = vunpack.c.l.b16 %v2692
        %v2763 = vunpack.c.l.b16 %v2693
        %v2764 = vunpack.c.l.b16 %v2694
        %v2765 = vunpack.c.l.b16 %v2695
        %v2766 = vunpack.c.l.b16 %v2696
        %v2767 = vunpack.c.l.b16 %v2697
        %v2768 = vunpack.c.l.b16 %v2698
        %v2769 = vunpack.c.l.b16 %v2699
        %v2770 = vunpack.c.l.b16 %v2700
        %v2771 = vunpack.c.l.b16 %v2701
        %v2772 = vunpack.c.l.b16 %v2702
        %v2773 = vunpack.c.l.b16 %v2703
        %v2774 = vunpack.c.l.b16 %v2704
        %v2775 = vunpack.c.l.b16 %v2705
        %v2776 = vunpack.c.l.b16 %v2706
        %v2777 = vunpack.c.l.b16 %v2707
        %v2778 = vunpack.c.l.b16 %v2708
        %v2779 = vunpack.c.l.b16 %v2709
        %v2780 = vunpack.c.l.b16 %v2710
        %v2781 = vunpack.c.l.b16 %v2711
        %v2782 = vunpack.c.l.b16 %v2712
        %v2783 = vunpack.c.l.b16 %v2713
        %v2784 = vunpack.c.l.b16 %v2714
        %v2785 = vunpack.c.l.b16 %v2715
        %v2786 = vunpack.c.l.b16 %v2716
        %v2787 = vunpack.c.l.b16 %v2717
        %v2788 = vpack.c.b16 %v2757, %v2756
        %v2789 = vpack.c.b16 %v2759, %v2758
        %v2790 = vpack.c.b16 %v2761, %v2760
        %v2791 = vpack.c.b16 %v2763, %v2762
        %v2792 = vpack.c.b16 %v2765, %v2764
        %v2793 = vpack.c.b16 %v2767, %v2766
        %v2794 = vpack.c.b16 %v2769, %v2768
        %v2795 = vpack.c.b16 %v2771, %v2770
        %v2796 = vpack.c.b16 %v2773, %v2772
        %v2797 = vpack.c.b16 %v2775, %v2774
        %v2798 = vpack.c.b16 %v2777, %v2776
        %v2799 = vpack.c.b16 %v2779, %v2778
        %v2800 = vpack.c.b16 %v2781, %v2780
        %v2801 = vpack.c.b16 %v2783, %v2782
        %v2802 = vpack.c.b16 %v2785, %v2784
        %v2803 = vpack.c.b16 %v2787, %v2786
        %2820 = vmatprep.subr.bf16.mxu0 0
        %2821 = vmatpush1.bf16.msra.mxu0 %v2795
        %2822 = vmatprep.subr.bf16.mxu0 0
        %2823 = vmatpush1.bf16.msra.mxu0 %v2794
        %2824 = vmatprep.subr.bf16.mxu0 0
        %2825 = vmatpush1.bf16.msra.mxu0 %v2793
        %2826 = vmatprep.subr.bf16.mxu0 0
        %2827 = vmatpush1.bf16.msra.mxu0 %v2792
        %2828 = vmatprep.subr.bf16.mxu0 0
        %2829 = vmatpush1.bf16.msra.mxu0 %v2791
        %2830 = vmatprep.subr.bf16.mxu0 0
        %2831 = vmatpush1.bf16.msra.mxu0 %v2790
        %2832 = vmatprep.subr.bf16.mxu0 0
        %2833 = vmatpush1.bf16.msra.mxu0 %v2789
        %2834 = vmatprep.subr.bf16.mxu0 0
        %2835 = vmatpush1.bf16.msra.mxu0 %v2788
        %2836 = vmatprep.subr.bf16.mxu0 0
        %2837 = vmatpush2.bf16.msra.mxu0 %v2803
        %2838 = vmatprep.subr.bf16.mxu0 0
        %2839 = vmatpush2.bf16.msra.mxu0 %v2802
        %2840 = vmatprep.subr.bf16.mxu0 0
        %2841 = vmatpush2.bf16.msra.mxu0 %v2801
        %2842 = vmatprep.subr.bf16.mxu0 0
        %2843 = vmatpush2.bf16.msra.mxu0 %v2800
        %2844 = vmatprep.subr.bf16.mxu0 0
        %2845 = vmatpush2.bf16.msra.mxu0 %v2799
        %2846 = vmatprep.subr.bf16.mxu0 0
        %2847 = vmatpush2.bf16.msra.mxu0 %v2798
        %2848 = vmatprep.subr.bf16.mxu0 0
        %2849 = vmatpush2.bf16.msra.mxu0 %v2797
        %2850 = vmatprep.subr.bf16.mxu0 0
        %2851 = vmatpush2.bf16.msra.mxu0 %v2796
        %2852 = vmatprep.mubr.bf16.mxu0 %v2685
        %2853 = vmatmul.mubr.bf16.gmra.mxu0 %v2684
        %v2854 = vpop.f32.mrf.mxu0
        %v2855 = vadd.f32 %v2722, %v2854
        %v2856 = vpop.f32.mrf.mxu0
        %v2857 = vpop.f32.mrf.mxu0
        %v2858 = vpop.f32.mrf.mxu0
        %2859 = vdwg.mxu0
        %v2860 = vadd.f32 %v2855, %v2524
        %2861 = vadd.xlane.f32.xlu0 %v2860
        %v2862 = vpop.xlane.xlu0 %2861
        %v2863 = vmul.f32 %v2862, %v2501
        %v2864 = vsub.f32 %v2860, %v2863
        %v2865 = vmul.f32 %v2864, %v2864
        %2866 = vadd.xlane.f32.xlu0 %v2865
        %v2867 = vpop.xlane.xlu0 %2866
        %v2868 = vmul.f32 %v2867, %v2501
        %v2869 = vadd.f32 %v2868, 1e-05
        %v2870 = vrsqrt.pop %v2869
        %v2871 = vmul.f32 %v2864, %v2870
        %v2873 = vlaneseq
        %v2874 = vshrl.u32 %v2873, 7
        %v2875 = vsub.s32 0, %v2874
        %v2876 = vrot.slane %v538, %v2875
        %v2878 = vmul.f32 %v2871, %v2876
        %v2880 = vlaneseq
        %v2881 = vshrl.u32 %v2880, 7
        %v2882 = vsub.s32 0, %v2881
        %v2883 = vrot.slane %v539, %v2882
        %v2885 = vadd.f32 %v2878, %v2883
        %2886 = vst [vmem:[%s520] sm:$0xff] %v2885
        %s2887 = sand.u32 %s378, 1
        %s2888 = scalar_lea.sflag [#allocation5], %s2887
        %s2889 = sand.u32 %s378, 1
        %s2890 = smul.addr %s2889, 8
        %s2891 = scalar_lea.vmem [#allocation4], %s2890
        // Predicated region
        $region85: #{tpu_custom_call.1} parent=79 // pred_check
          %p2892 = pneg %p388
        $region86: #{tpu_custom_call.1} parent=79 // pred_check_branch
          %2894 = sbr.rel (%p2892) target = $region88
        $region87: #{tpu_custom_call.1} parent=79 // pred_region
          %s2896 = ssub.s32 128, 128
          %2897 = vsyncadd %s2888, %s2896
          %s2898 = sadd.s32 %s34, %s33
          %s2899 = smul.addr %s2898, 128
          %s2900 = scalar_lea.hbm %s15, %s2899
          %s2902 = sshll.u32 %s2891, 4
          %s2903 = int_to_ptr.vmem [resolvable:$true] %s2902
          %2905 = dma.vmem_to_hbm [thread:$0]  %s2903, 128, %s2900, %s2888
        $region88: #{tpu_custom_call.1} parent=79 // pred_fallthru
          _
      $region80: #{tpu_custom_call.1} parent=5 // pred_fallthru
        _
      %p2906 = scmp.le.s32.totalorder 2, %s24
      // Predicated region
      $region89: #{tpu_custom_call.1} parent=5 // pred_check
        %p2907 = pneg %p2906
      $region90: #{tpu_custom_call.1} parent=5 // pred_check_branch
        %2909 = sbr.rel (%p2907) target = $region92
      $region91: #{tpu_custom_call.1} parent=5 // pred_region
        %s2910 = ssub.s32 %s24, 2
        // Predicated region
        $region93: #{tpu_custom_call.1} parent=91 // pred_check
          %p2911 = pneg %p394
        $region94: #{tpu_custom_call.1} parent=91 // pred_check_branch
          %2913 = sbr.rel (%p2911) target = $region96
        $region95: #{tpu_custom_call.1} parent=91 // pred_region
          %s2914 = sand.u32 %s379, 1
          %s2915 = scalar_lea.sflag [#allocation5], %s2914
          %s2916 = sand.u32 %s379, 1
          %s2917 = smul.addr %s2916, 8
          %s2918 = scalar_lea.vmem [#allocation4], %s2917
          %2919 = dma.done %s2915, 128
        $region96: #{tpu_custom_call.1} parent=91 // pred_fallthru
          _
      $region92: #{tpu_custom_call.1} parent=5 // pred_fallthru
        _
    $region6: #{tpu_custom_call.1} parent=1 // loop_footer
      %s28 = sadd.s32 1, %s24
    $region7: #{tpu_custom_call.1} parent=1 // loop_footer_branch
      %23 = sbr.rel target = $region3
    $region8: #{tpu_custom_call.1} parent=1 // loop_exit
      _
    %2920 = vsyncpa [#allocation5], 1
    %s2921 = scalar_lea.sflag [#allocation5], 1
    %2922 = vsyncpa %s2921, 1

</llo_original>
